<compile_context>
chip_gen: v7x
topology: tpu7x:2x2x1
jax: 0.10.0
libtpu: 0.0.40
codegen_flags: <defaults>
</compile_context>

<pallas_src>
import functools

import jax
import jax.numpy as jnp
import numpy as np
from jax.experimental import pallas as pl
from jax.experimental.pallas import tpu as pltpu

_LANE = 128
_SUBLANE = 8


def _round_up(n, m):
    return ((n + m - 1) // m) * m


def _feature_kernel(x_ref, w1_ref, b1_ref, w2_ref, b2_ref, o_ref, *,
                    block_b, seq_len):
    # x_ref block: (TB*L, C) f32, already flattened by the wrapper.
    xm = x_ref[...]                                         # (M, C)

    # Layer 1 on the MXU (it has ~100% slack here), f32 accumulation.
    h = jnp.dot(xm, w1_ref[...], preferred_element_type=jnp.float32)
    h = jnp.maximum(h + b1_ref[...], 0.0)                   # (M, Hp)

    # Layer 2 on the MXU, kept in f32: the kernel is latency/overhead bound,
    # so the bf16 cast bought nothing and cost a full (M, Hp) VPU convert.
    y = jnp.dot(h, w2_ref[...], preferred_element_type=jnp.float32)
    y = jnp.maximum(y + b2_ref[...], 0.0)                   # (M, Fp)

    # Global max pool over length, per sample -> lane-dense (TB, Fp) store.
    # seq_len % 8 == 0 (asserted in wrapper) keeps this reshape a free
    # sublane split, no VMEM relayout copy.
    o_ref[...] = jnp.max(y.reshape(block_b, seq_len, -1), axis=1)


def pad_feature_params(w1, b1, w2, b2):
    """Lane-pad the pointwise-conv weights once (call at init, not per step)."""
    C, H = w1.shape
    Hw, F = w2.shape
    assert Hw == H
    Hp = _round_up(H, _LANE)
    Fp = _round_up(F, _LANE)
    w1p = jnp.zeros((C, Hp), jnp.float32).at[:, :H].set(w1.astype(jnp.float32))
    b1p = jnp.zeros((1, Hp), jnp.float32).at[:, :H].set(
        b1.reshape(1, H).astype(jnp.float32))
    w2p = jnp.zeros((Hp, Fp), jnp.float32).at[:H, :F].set(
        w2.astype(jnp.float32))
    b2p = jnp.zeros((1, Fp), jnp.float32).at[:, :F].set(
        b2.reshape(1, F).astype(jnp.float32))
    return w1p, b1p, w2p, b2p


def meta_template_forward(x_blc, w1p, b1p, w2p, b2p, *, hidden, feat_dim):
    """x_blc: (B, L, C) float32 -> (B, feat_dim) float32 embeddings.

    w1p/b1p/w2p/b2p are the lane-padded params from `pad_feature_params`.
    """
    B, L, C = x_blc.shape
    assert L % _SUBLANE == 0, "L must be a multiple of 8 (free pool reshape)"
    assert w1p.shape[0] == C
    Hp = w1p.shape[1]
    Fp = w2p.shape[1]

    # Collapse the grid: at most 2 steps.  Two steps feed v7x's two
    # TensorCores on the 'parallel' axis; the extra step is negligible on
    # single-core v5e/v6e.  Everything fits in VMEM comfortably.
    num_blocks = 2 if B > _SUBLANE else 1
    block_b = _round_up(pl.cdiv(B, num_blocks), _SUBLANE)
    Bp = num_blocks * block_b

    xp = x_blc.astype(jnp.float32)
    if Bp != B:
        xp = jnp.pad(xp, ((0, Bp - B), (0, 0), (0, 0)))
    # Flatten in the wrapper (contiguous, free) so the kernel sees (M, C).
    xm = xp.reshape(Bp * L, C)

    m_total = Bp * L
    # True FLOPs (un-padded widths) — advisory only for XLA scheduling.
    flops = 2 * m_total * (C * hidden + hidden * feat_dim)
    bytes_accessed = (xm.size * 4 + w1p.size * 4 + b1p.size * 4
                      + w2p.size * 4 + b2p.size * 4 + Bp * Fp * 4)

    kernel = functools.partial(_feature_kernel, block_b=block_b, seq_len=L)

    out = pl.pallas_call(
        kernel,
        out_shape=jax.ShapeDtypeStruct((Bp, Fp), jnp.float32),
        grid=(num_blocks,),
        in_specs=[
            pl.BlockSpec((block_b * L, C), lambda b: (b, 0)),
            # Constant across the grid: untiled VMEM residents, so they are
            # not re-DMA'd / double-buffered every step.
            pl.BlockSpec(memory_space=pltpu.MemorySpace.VMEM),  # w1
            pl.BlockSpec(memory_space=pltpu.MemorySpace.VMEM),  # b1
            pl.BlockSpec(memory_space=pltpu.MemorySpace.VMEM),  # w2
            pl.BlockSpec(memory_space=pltpu.MemorySpace.VMEM),  # b2
        ],
        out_specs=pl.BlockSpec((block_b, Fp), lambda b: (b, 0)),
        compiler_params=pltpu.CompilerParams(
            dimension_semantics=("parallel",)),
        cost_estimate=pl.CostEstimate(flops=flops, transcendentals=0,
                                      bytes_accessed=bytes_accessed),
    )(xm, w1p, b1p, w2p, b2p)

    # Slice off batch / feature padding (padded rows/cols never contaminate
    # real samples: the max pool is per-sample and padded columns are zero).
    return out[:B, :feat_dim]


class MetaTemplatePallas:
    """Mirrors MetaTemplate: holds n_way / n_support / n_query and a feature
    backbone; forward(x) permutes to channel-major and runs the backbone."""

    def __init__(self, n_way, n_support, in_channels, hidden, feat_dim, key):
        self.n_way = n_way
        self.n_support = n_support
        self.n_query = 15
        self.hidden = hidden
        self.feat_dim = feat_dim
        k1, k2, k3, k4 = jax.random.split(key, 4)
        # Conv1d(k=1) weights stored as (in, out) matmul matrices.
        self.w1 = (jax.random.normal(k1, (in_channels, hidden), jnp.float32)
                   * (1.0 / np.sqrt(in_channels)))
        self.b1 = jax.random.normal(k2, (hidden,), jnp.float32) * 0.01
        self.w2 = (jax.random.normal(k3, (hidden, feat_dim), jnp.float32)
                   * (1.0 / np.sqrt(hidden)))
        self.b2 = jax.random.normal(k4, (feat_dim,), jnp.float32) * 0.01
        # Pad / cast once here, not on every forward call.
        self._w1p, self._b1p, self._w2p, self._b2p = pad_feature_params(
            self.w1, self.b1, self.w2, self.b2)

    def forward(self, x):
        # PyTorch: x (B, L, C) --permute(0,2,1)--> (B, C, L) --feature--> (B, F)
        # The kernel operates directly on the channels-last layout; the
        # permute is absorbed into the layout choice, so it is a no-op here.
        return meta_template_forward(x, self._w1p, self._b1p, self._w2p,
                                     self._b2p, hidden=self.hidden,
                                     feat_dim=self.feat_dim)

    # TODO(synk): set_forward / set_forward_loss are abstract in the PyTorch
    # module (subclass-specific); only the concrete forward() is implemented.


def _reference(x, w1, b1, w2, b2):
    hp = jax.lax.Precision.HIGHEST
    h = jnp.maximum(jnp.einsum("blc,ch->blh", x, w1, precision=hp) + b1, 0.0)
    y = jnp.maximum(jnp.einsum("blh,hf->blf", h, w2, precision=hp) + b2, 0.0)
    return jnp.max(y, axis=1)


if __name__ == "__main__":
    key = jax.random.PRNGKey(0)
    k_x, k_p = jax.random.split(key)

    # One few-shot episode worth of samples: B = n_way*(n_support+n_query),
    # sequence length L, input channels C; backbone widths H, F.
    n_way, n_support, n_query = 5, 1, 15
    B = n_way * (n_support + n_query)      # 80
    L, C = 16, 4
    H, F = 32, 32

    x = jax.random.normal(k_x, (B, L, C), jnp.float32)

    model = MetaTemplatePallas(n_way=n_way, n_support=n_support,
                               in_channels=C, hidden=H, feat_dim=F, key=k_p)

    out = jax.block_until_ready(model.forward(x))

    ref = _reference(x, model.w1, model.b1, model.w2, model.b2)
    # f32 MXU path; tolerance covers possible bf16-pass default precision.
    np.testing.assert_allclose(np.asarray(out), np.asarray(ref),
                               rtol=2e-2, atol=2e-2)
    assert out.shape == (B, F)
    print("KERNEL_OK")
</pallas_src>

<mosaic_0001>
module attributes {stable_mosaic.version = 11 : i64} {
  func.func @_feature_kernel(%arg0: i32, %arg1: memref<640x4xf32, #tpu.memory_space<vmem>>, %arg2: memref<4x128xf32, #tpu.memory_space<vmem>>, %arg3: memref<1x128xf32, #tpu.memory_space<vmem>>, %arg4: memref<128x128xf32, #tpu.memory_space<vmem>>, %arg5: memref<1x128xf32, #tpu.memory_space<vmem>>, %arg6: memref<40x128xf32, #tpu.memory_space<vmem>>) attributes {dimension_semantics = [#tpu.dimension_semantics<parallel>], iteration_bounds = array<i64: 2>, scalar_prefetch = 0 : i64, scratch_operands = 0 : i64, tpu.core_type = #tpu.core_type<tc>, window_params = [{transform_indices = @transform_0, window_bounds = array<i64: 640, 4>}, {pipeline_mode = #tpu.pipeline_mode<synchronous>, transform_indices = @transform_1, window_bounds = array<i64: 4, 128>}, {pipeline_mode = #tpu.pipeline_mode<synchronous>, transform_indices = @transform_2, window_bounds = array<i64: 1, 128>}, {pipeline_mode = #tpu.pipeline_mode<synchronous>, transform_indices = @transform_3, window_bounds = array<i64: 128, 128>}, {pipeline_mode = #tpu.pipeline_mode<synchronous>, transform_indices = @transform_4, window_bounds = array<i64: 1, 128>}, {transform_indices = @transform_5, window_bounds = array<i64: 40, 128>}]} {
    %c0 = arith.constant 0 : index
    %c0_0 = arith.constant 0 : index
    %0 = vector.load %arg1[%c0, %c0_0] : memref<640x4xf32, #tpu.memory_space<vmem>>, vector<640x4xf32>
    %c0_1 = arith.constant 0 : index
    %c0_2 = arith.constant 0 : index
    %1 = vector.load %arg2[%c0_1, %c0_2] : memref<4x128xf32, #tpu.memory_space<vmem>>, vector<4x128xf32>
    %cst = arith.constant dense<0.000000e+00> : vector<640x128xf32>
    %2 = tpu.matmul %0, %1, %cst {dimension_numbers = #tpu.dot_dimension_numbers<[1], [0], [0], [1], [0, 0, 1, 1], [], []>} : vector<640x4xf32>, vector<4x128xf32>, vector<640x128xf32> -> vector<640x128xf32>
    %c0_3 = arith.constant 0 : index
    %c0_4 = arith.constant 0 : index
    %3 = vector.load %arg3[%c0_3, %c0_4] : memref<1x128xf32, #tpu.memory_space<vmem>>, vector<1x128xf32>
    %4 = vector.broadcast %3 : vector<1x128xf32> to vector<640x128xf32>
    %5 = arith.addf %2, %4 : vector<640x128xf32>
    %cst_5 = arith.constant 0.000000e+00 : f32
    %6 = vector.broadcast %cst_5 : f32 to vector<640x128xf32>
    %7 = arith.maximumf %5, %6 : vector<640x128xf32>
    %c0_6 = arith.constant 0 : index
    %c0_7 = arith.constant 0 : index
    %8 = vector.load %arg4[%c0_6, %c0_7] : memref<128x128xf32, #tpu.memory_space<vmem>>, vector<128x128xf32>
    %cst_8 = arith.constant dense<0.000000e+00> : vector<640x128xf32>
    %9 = tpu.matmul %7, %8, %cst_8 {dimension_numbers = #tpu.dot_dimension_numbers<[1], [0], [0], [1], [0, 0, 1, 1], [], []>} : vector<640x128xf32>, vector<128x128xf32>, vector<640x128xf32> -> vector<640x128xf32>
    %c0_9 = arith.constant 0 : index
    %c0_10 = arith.constant 0 : index
    %10 = vector.load %arg5[%c0_9, %c0_10] : memref<1x128xf32, #tpu.memory_space<vmem>>, vector<1x128xf32>
    %11 = vector.broadcast %10 : vector<1x128xf32> to vector<640x128xf32>
    %12 = arith.addf %9, %11 : vector<640x128xf32>
    %cst_11 = arith.constant 0.000000e+00 : f32
    %13 = vector.broadcast %cst_11 : f32 to vector<640x128xf32>
    %14 = arith.maximumf %12, %13 : vector<640x128xf32>
    %15 = vector.shape_cast %14 : vector<640x128xf32> to vector<40x16x128xf32>
    %cst_12 = arith.constant dense<0xFF800000> : vector<40x128xf32>
    %16 = vector.multi_reduction <maximumf>, %15, %cst_12 [1] : vector<40x16x128xf32> to vector<40x128xf32>
    %c0_13 = arith.constant 0 : index
    %c0_14 = arith.constant 0 : index
    %17 = vector.load %arg6[%c0_13, %c0_14] : memref<40x128xf32, #tpu.memory_space<vmem>>, vector<40x128xf32>
    tpu.vector_store %arg6[%c0_13, %c0_14], %16 {strides = array<i32>} : memref<40x128xf32, #tpu.memory_space<vmem>>, vector<40x128xf32>,
    return
  }
  func.func @transform_0(%arg0: i32) -> (i32, i32) {
    %c0_i32 = arith.constant 0 : i32
    %c0_i32_0 = arith.constant 0 : i32
    return %arg0, %c0_i32 : i32, i32
  }
  func.func @transform_1(%arg0: i32) -> (i32, i32) {
    %c0_i32 = arith.constant 0 : i32
    %c0_i32_0 = arith.constant 0 : i32
    %c0_i32_1 = arith.constant 0 : i32
    return %c0_i32, %c0_i32_0 : i32, i32
  }
  func.func @transform_2(%arg0: i32) -> (i32, i32) {
    %c0_i32 = arith.constant 0 : i32
    %c0_i32_0 = arith.constant 0 : i32
    %c0_i32_1 = arith.constant 0 : i32
    return %c0_i32, %c0_i32_0 : i32, i32
  }
  func.func @transform_3(%arg0: i32) -> (i32, i32) {
    %c0_i32 = arith.constant 0 : i32
    %c0_i32_0 = arith.constant 0 : i32
    %c0_i32_1 = arith.constant 0 : i32
    return %c0_i32, %c0_i32_0 : i32, i32
  }
  func.func @transform_4(%arg0: i32) -> (i32, i32) {
    %c0_i32 = arith.constant 0 : i32
    %c0_i32_0 = arith.constant 0 : i32
    %c0_i32_1 = arith.constant 0 : i32
    return %c0_i32, %c0_i32_0 : i32, i32
  }
  func.func @transform_5(%arg0: i32) -> (i32, i32) {
    %c0_i32 = arith.constant 0 : i32
    %c0_i32_0 = arith.constant 0 : i32
    return %arg0, %c0_i32 : i32, i32
  }
}

</mosaic_0001>

<llo_original>
// kernel: tpu_custom_call.1
$region0: #{tpu_custom_call.1}
  #allocation0 [shape = 'u32[]', space=smem, size = 0x4, offset = 0x4, fixed_abs, tag = 'smem constant byte address 0x4 - core index']
  #allocation1 [shape = 'u32[144,128]{1,0:T(1,128)}', space=vmem, size = 0x12000, scoped, tag = 'internal scratch']
  %s0 = inlined_call_operand.vmem [shape: f32[1280,4], index: 0, kind: input, shape index: {}]
  %s1 = inlined_call_operand.vmem [shape: f32[4,128], index: 1, kind: input, shape index: {}]
  %s2 = inlined_call_operand.vmem [shape: f32[1,128], index: 2, kind: input, shape index: {}]
  %s3 = inlined_call_operand.vmem [shape: f32[128,128], index: 3, kind: input, shape index: {}]
  %s4 = inlined_call_operand.vmem [shape: f32[1,128], index: 4, kind: input, shape index: {}]
  %s5 = inlined_call_operand.hbm [shape: f32[80,128], index: 5, kind: output, shape index: {}]
  %s6 = sld [smem:[#allocation0]]
  $region53: #{tpu_custom_call.1} parent=0
    _
  %s8 = ssub.s32 1, %s6
  %s9 = scalar_select 0, %s8, %s6
  $region1: #{tpu_custom_call.1} parent=0
    #allocation2 [shape = 'u8[40960]{0}', space=vmem, size = 0xa000, scoped, tag = 'output window, operand 0']
    #allocation3 [shape = 's32[2]{0}', space=sflag, size = 0x8, scoped, tag = 'scoped memory for tpu_custom_call.1']
    %10 = vsyncpa [#allocation3], 0
    %s11 = scalar_lea.sflag [#allocation3], 1
    %12 = vsyncpa %s11, 0
    loop: start=0, step=1, limit=4
    $region2: #{tpu_custom_call.1} parent=1 // loop_pre_header
      _
    $region3: #{tpu_custom_call.1} parent=1 // loop_header
      %s14 = sphi 0, %s18
      %p15 = scmp.ge.s32.totalorder %s14, 4
      %s24 = sphi 0, %s26
      %s27 = sphi 0, %s24
      %s28 = sphi 0, %s27
      %s44 = sphi 0, %s28
      %s48 = sphi 0, %s48
      %s50 = sphi 0, %s48
      %s51 = sphi 0, %s50
      %s65 = sphi 0, %s51
      %s69 = sphi 0, %s69
      %s71 = sphi 0, %s69
      %s72 = sphi 0, %s71
      %s86 = sphi 0, %s72
      %s90 = sphi 0, %s90
      %s92 = sphi 0, %s90
      %s93 = sphi 0, %s92
      %s107 = sphi 0, %s93
      %s111 = sphi 0, %s111
      %s113 = sphi 0, %s111
      %s114 = sphi 0, %s113
      %s128 = sphi 0, %s114
      %s134 = sphi 0, %s136
      %s137 = sphi 0, %s134
      %s138 = sphi 0, %s137
      %s154 = sphi 0, %s138
    $region4: #{tpu_custom_call.1} parent=1 // loop_header_branch
      %17 = sbr.rel (%p15) target = $region8
    $region5: #{tpu_custom_call.1} parent=1 // loop_body
      %s19 = ssub.s32 %s14, 1
      %s20 = ssub.s32 %s14, 2
      %s21 = sadd.s32 %s14, 1
      %s22 = ssub.s32 %s14, %s21
      %p23 = scmp.eq.s32.totalorder %s22, 0
      %s25 = sadd.s32 %s24, 1
      %s26 = scalar_select %p23, %s24, %s25
      %p29 = pneg %p23
      %p30 = scmp.eq.s32.totalorder %s14, 1
      %p31 = por %p29, %p30
      %p32 = scmp.ne.s32.totalorder %s24, %s27
      %p33 = scmp.eq.s32.totalorder %s14, 0
      %p34 = por %p32, %p33
      %p35 = scmp.ne.s32.totalorder %s24, %s27
      %p36 = scmp.eq.s32.totalorder %s19, 1
      %p37 = por %p35, %p36
      %p38 = scmp.ne.s32.totalorder %s27, %s28
      %p39 = scmp.eq.s32.totalorder %s19, 0
      %p40 = por %p38, %p39
      %p41 = scmp.ne.s32.totalorder %s27, %s28
      %p42 = scmp.eq.s32.totalorder %s20, 1
      %p43 = por %p41, %p42
      %p45 = scmp.ne.s32.totalorder %s28, %s44
      %p46 = scmp.eq.s32.totalorder %s20, 0
      %p47 = por %p45, %p46
      %s49 = sadd.s32 %s48, 1
      %p52 = scmp.eq.s32.totalorder %s14, 1
      %p53 = scmp.ne.s32.totalorder %s48, %s50
      %p54 = scmp.eq.s32.totalorder %s14, 0
      %p55 = por %p53, %p54
      %p56 = scmp.ne.s32.totalorder %s48, %s50
      %p57 = scmp.eq.s32.totalorder %s19, 1
      %p58 = por %p56, %p57
      %p59 = scmp.ne.s32.totalorder %s50, %s51
      %p60 = scmp.eq.s32.totalorder %s19, 0
      %p61 = por %p59, %p60
      %p62 = scmp.ne.s32.totalorder %s50, %s51
      %p63 = scmp.eq.s32.totalorder %s20, 1
      %p64 = por %p62, %p63
      %p66 = scmp.ne.s32.totalorder %s51, %s65
      %p67 = scmp.eq.s32.totalorder %s20, 0
      %p68 = por %p66, %p67
      %s70 = sadd.s32 %s69, 1
      %p73 = scmp.eq.s32.totalorder %s14, 1
      %p74 = scmp.ne.s32.totalorder %s69, %s71
      %p75 = scmp.eq.s32.totalorder %s14, 0
      %p76 = por %p74, %p75
      %p77 = scmp.ne.s32.totalorder %s69, %s71
      %p78 = scmp.eq.s32.totalorder %s19, 1
      %p79 = por %p77, %p78
      %p80 = scmp.ne.s32.totalorder %s71, %s72
      %p81 = scmp.eq.s32.totalorder %s19, 0
      %p82 = por %p80, %p81
      %p83 = scmp.ne.s32.totalorder %s71, %s72
      %p84 = scmp.eq.s32.totalorder %s20, 1
      %p85 = por %p83, %p84
      %p87 = scmp.ne.s32.totalorder %s72, %s86
      %p88 = scmp.eq.s32.totalorder %s20, 0
      %p89 = por %p87, %p88
      %s91 = sadd.s32 %s90, 1
      %p94 = scmp.eq.s32.totalorder %s14, 1
      %p95 = scmp.ne.s32.totalorder %s90, %s92
      %p96 = scmp.eq.s32.totalorder %s14, 0
      %p97 = por %p95, %p96
      %p98 = scmp.ne.s32.totalorder %s90, %s92
      %p99 = scmp.eq.s32.totalorder %s19, 1
      %p100 = por %p98, %p99
      %p101 = scmp.ne.s32.totalorder %s92, %s93
      %p102 = scmp.eq.s32.totalorder %s19, 0
      %p103 = por %p101, %p102
      %p104 = scmp.ne.s32.totalorder %s92, %s93
      %p105 = scmp.eq.s32.totalorder %s20, 1
      %p106 = por %p104, %p105
      %p108 = scmp.ne.s32.totalorder %s93, %s107
      %p109 = scmp.eq.s32.totalorder %s20, 0
      %p110 = por %p108, %p109
      %s112 = sadd.s32 %s111, 1
      %p115 = scmp.eq.s32.totalorder %s14, 1
      %p116 = scmp.ne.s32.totalorder %s111, %s113
      %p117 = scmp.eq.s32.totalorder %s14, 0
      %p118 = por %p116, %p117
      %p119 = scmp.ne.s32.totalorder %s111, %s113
      %p120 = scmp.eq.s32.totalorder %s19, 1
      %p121 = por %p119, %p120
      %p122 = scmp.ne.s32.totalorder %s113, %s114
      %p123 = scmp.eq.s32.totalorder %s19, 0
      %p124 = por %p122, %p123
      %p125 = scmp.ne.s32.totalorder %s113, %s114
      %p126 = scmp.eq.s32.totalorder %s20, 1
      %p127 = por %p125, %p126
      %p129 = scmp.ne.s32.totalorder %s114, %s128
      %p130 = scmp.eq.s32.totalorder %s20, 0
      %p131 = por %p129, %p130
      %s132 = ssub.s32 %s14, %s21
      %p133 = scmp.eq.s32.totalorder %s132, 0
      %s135 = sadd.s32 %s134, 1
      %s136 = scalar_select %p133, %s134, %s135
      %p139 = pneg %p133
      %p140 = scmp.eq.s32.totalorder %s14, 1
      %p141 = por %p139, %p140
      %p142 = scmp.ne.s32.totalorder %s134, %s137
      %p143 = scmp.eq.s32.totalorder %s14, 0
      %p144 = por %p142, %p143
      %p145 = scmp.ne.s32.totalorder %s134, %s137
      %p146 = scmp.eq.s32.totalorder %s19, 1
      %p147 = por %p145, %p146
      %p148 = scmp.ne.s32.totalorder %s137, %s138
      %p149 = scmp.eq.s32.totalorder %s19, 0
      %p150 = por %p148, %p149
      %p151 = scmp.ne.s32.totalorder %s137, %s138
      %p152 = scmp.eq.s32.totalorder %s20, 1
      %p153 = por %p151, %p152
      %p155 = scmp.ne.s32.totalorder %s138, %s154
      %p156 = scmp.eq.s32.totalorder %s20, 0
      %p157 = por %p155, %p156
      %p158 = scmp.le.s32.totalorder 1, %s14
      %p159 = scmp.lt.s32.totalorder %s14, 3
      %p160 = pnand %p158, %p159
      %p161 = pneg %p160
      // Predicated region
      $region9: #{tpu_custom_call.1} parent=5 // pred_check
        _
      $region10: #{tpu_custom_call.1} parent=5 // pred_check_branch
        %163 = sbr.rel (%p160) target = $region12
      $region11: #{tpu_custom_call.1} parent=5 // pred_region
        %s164 = ssub.s32 %s14, 1
        // Predicated region
        $region13: #{tpu_custom_call.1} parent=11 // pred_check
          %p165 = pneg %p61
        $region14: #{tpu_custom_call.1} parent=11 // pred_check_branch
          %167 = sbr.rel (%p165) target = $region16
        $region15: #{tpu_custom_call.1} parent=11 // pred_region
          _
        $region16: #{tpu_custom_call.1} parent=11 // pred_fallthru
          _
        // Predicated region
        $region17: #{tpu_custom_call.1} parent=11 // pred_check
          %p168 = pneg %p82
        $region18: #{tpu_custom_call.1} parent=11 // pred_check_branch
          %170 = sbr.rel (%p168) target = $region20
        $region19: #{tpu_custom_call.1} parent=11 // pred_region
          _
        $region20: #{tpu_custom_call.1} parent=11 // pred_fallthru
          _
        // Predicated region
        $region21: #{tpu_custom_call.1} parent=11 // pred_check
          %p171 = pneg %p103
        $region22: #{tpu_custom_call.1} parent=11 // pred_check_branch
          %173 = sbr.rel (%p171) target = $region24
        $region23: #{tpu_custom_call.1} parent=11 // pred_region
          _
        $region24: #{tpu_custom_call.1} parent=11 // pred_fallthru
          _
        // Predicated region
        $region25: #{tpu_custom_call.1} parent=11 // pred_check
          %p174 = pneg %p124
        $region26: #{tpu_custom_call.1} parent=11 // pred_check_branch
          %176 = sbr.rel (%p174) target = $region28
        $region27: #{tpu_custom_call.1} parent=11 // pred_region
          _
        $region28: #{tpu_custom_call.1} parent=11 // pred_fallthru
          _
      $region12: #{tpu_custom_call.1} parent=5 // pred_fallthru
        _
      %p177 = scmp.lt.s32.totalorder %s14, 2
      // Predicated region
      $region29: #{tpu_custom_call.1} parent=5 // pred_check
        %p178 = pneg %p177
      $region30: #{tpu_custom_call.1} parent=5 // pred_check_branch
        %180 = sbr.rel (%p178) target = $region32
      $region31: #{tpu_custom_call.1} parent=5 // pred_region
        // Predicated region
        $region33: #{tpu_custom_call.1} parent=31 // pred_check
          %p181 = pneg %p34
        $region34: #{tpu_custom_call.1} parent=31 // pred_check_branch
          %183 = sbr.rel (%p181) target = $region36
        $region35: #{tpu_custom_call.1} parent=31 // pred_region
          %s184 = smul.u32 80, %s14
          %p185 = scmp.lt.s32.totalorder %s184, 159
          %s186 = scalar_select %p185, %s184, 159
          %s187 = smul.addr %s186, 8
          %s188 = scalar_lea.vmem %s0, %s187
          %s189 = smul.u32 80, %s14
        $region36: #{tpu_custom_call.1} parent=31 // pred_fallthru
          _
      $region32: #{tpu_custom_call.1} parent=5 // pred_fallthru
        _
      %p190 = scmp.le.s32.totalorder 1, %s14
      %p191 = scmp.lt.s32.totalorder %s14, 3
      %p192 = pnand %p190, %p191
      %p193 = pneg %p192
      // Predicated region
      $region37: #{tpu_custom_call.1} parent=5 // pred_check
        _
      $region38: #{tpu_custom_call.1} parent=5 // pred_check_branch
        %195 = sbr.rel (%p192) target = $region40
      $region39: #{tpu_custom_call.1} parent=5 // pred_region
        %s196 = ssub.s32 %s14, 1
        %s197 = smul.u32 80, %s19
        %p198 = scmp.lt.s32.totalorder %s197, 159
        %s199 = scalar_select %p198, %s197, 159
        %s200 = smul.addr %s199, 8
        %s201 = scalar_lea.vmem %s0, %s200
        %p202 = pneg %p40
        %p203 = pneg %p37
        %p204 = pneg %p61
        %p205 = pneg %p58
        %p206 = pneg %p82
        %p207 = pneg %p79
        %p208 = pneg %p103
        %p209 = pneg %p100
        %p210 = pneg %p124
        %p211 = pneg %p121
        %p212 = pneg %p150
        %p213 = pneg %p147
        %s214 = sand.u32 %s137, 1
        %s215 = scalar_lea.sflag [#allocation3], %s214
        %s216 = sand.u32 %s137, 1
        %s217 = smul.addr %s216, 40
        %s218 = scalar_lea.vmem [#allocation2], %s217
        %s219 = smul.u32 80, %s19
        %p220 = scmp.lt.s32.totalorder %s219, 159
        %s221 = scalar_select %p220, %s219, 159
        %s222 = smul.addr %s221, 8
        %s223 = scalar_lea.vmem %s0, %s222
        %s224 = smul.u32 80, %s19
        %s225 = smul.u32 5, %s19
        %v226 = vld [vmem:[%s223] sm:$0xff]
        %v227 = vld [vmem:[%s223 + $0x8] sm:$0xff]
        %v228 = vld [vmem:[%s223 + $0x10] sm:$0xff]
        %v229 = vld [vmem:[%s223 + $0x18] sm:$0xff]
        %v230 = vld [vmem:[%s223 + $0x20] sm:$0xff]
        %v231 = vld [vmem:[%s223 + $0x28] sm:$0xff]
        %v232 = vld [vmem:[%s223 + $0x30] sm:$0xff]
        %v233 = vld [vmem:[%s223 + $0x38] sm:$0xff]
        %v234 = vld [vmem:[%s223 + $0x40] sm:$0xff]
        %v235 = vld [vmem:[%s223 + $0x48] sm:$0xff]
        %v236 = vld [vmem:[%s223 + $0x50] sm:$0xff]
        %v237 = vld [vmem:[%s223 + $0x58] sm:$0xff]
        %v238 = vld [vmem:[%s223 + $0x60] sm:$0xff]
        %v239 = vld [vmem:[%s223 + $0x68] sm:$0xff]
        %v240 = vld [vmem:[%s223 + $0x70] sm:$0xff]
        %v241 = vld [vmem:[%s223 + $0x78] sm:$0xff]
        %v242 = vld [vmem:[%s223 + $0x80] sm:$0xff]
        %v243 = vld [vmem:[%s223 + $0x88] sm:$0xff]
        %v244 = vld [vmem:[%s223 + $0x90] sm:$0xff]
        %v245 = vld [vmem:[%s223 + $0x98] sm:$0xff]
        %v246 = vld [vmem:[%s223 + $0xa0] sm:$0xff]
        %v247 = vld [vmem:[%s223 + $0xa8] sm:$0xff]
        %v248 = vld [vmem:[%s223 + $0xb0] sm:$0xff]
        %v249 = vld [vmem:[%s223 + $0xb8] sm:$0xff]
        %v250 = vld [vmem:[%s223 + $0xc0] sm:$0xff]
        %v251 = vld [vmem:[%s223 + $0xc8] sm:$0xff]
        %v252 = vld [vmem:[%s223 + $0xd0] sm:$0xff]
        %v253 = vld [vmem:[%s223 + $0xd8] sm:$0xff]
        %v254 = vld [vmem:[%s223 + $0xe0] sm:$0xff]
        %v255 = vld [vmem:[%s223 + $0xe8] sm:$0xff]
        %v256 = vld [vmem:[%s223 + $0xf0] sm:$0xff]
        %v257 = vld [vmem:[%s223 + $0xf8] sm:$0xff]
        %v258 = vld [vmem:[%s223 + $0x100] sm:$0xff]
        %v259 = vld [vmem:[%s223 + $0x108] sm:$0xff]
        %v260 = vld [vmem:[%s223 + $0x110] sm:$0xff]
        %v261 = vld [vmem:[%s223 + $0x118] sm:$0xff]
        %v262 = vld [vmem:[%s223 + $0x120] sm:$0xff]
        %v263 = vld [vmem:[%s223 + $0x128] sm:$0xff]
        %v264 = vld [vmem:[%s223 + $0x130] sm:$0xff]
        %v265 = vld [vmem:[%s223 + $0x138] sm:$0xff]
        %v266 = vld [vmem:[%s223 + $0x140] sm:$0xff]
        %v267 = vld [vmem:[%s223 + $0x148] sm:$0xff]
        %v268 = vld [vmem:[%s223 + $0x150] sm:$0xff]
        %v269 = vld [vmem:[%s223 + $0x158] sm:$0xff]
        %v270 = vld [vmem:[%s223 + $0x160] sm:$0xff]
        %v271 = vld [vmem:[%s223 + $0x168] sm:$0xff]
        %v272 = vld [vmem:[%s223 + $0x170] sm:$0xff]
        %v273 = vld [vmem:[%s223 + $0x178] sm:$0xff]
        %v274 = vld [vmem:[%s223 + $0x180] sm:$0xff]
        %v275 = vld [vmem:[%s223 + $0x188] sm:$0xff]
        %v276 = vld [vmem:[%s223 + $0x190] sm:$0xff]
        %v277 = vld [vmem:[%s223 + $0x198] sm:$0xff]
        %v278 = vld [vmem:[%s223 + $0x1a0] sm:$0xff]
        %v279 = vld [vmem:[%s223 + $0x1a8] sm:$0xff]
        %v280 = vld [vmem:[%s223 + $0x1b0] sm:$0xff]
        %v281 = vld [vmem:[%s223 + $0x1b8] sm:$0xff]
        %v282 = vld [vmem:[%s223 + $0x1c0] sm:$0xff]
        %v283 = vld [vmem:[%s223 + $0x1c8] sm:$0xff]
        %v284 = vld [vmem:[%s223 + $0x1d0] sm:$0xff]
        %v285 = vld [vmem:[%s223 + $0x1d8] sm:$0xff]
        %v286 = vld [vmem:[%s223 + $0x1e0] sm:$0xff]
        %v287 = vld [vmem:[%s223 + $0x1e8] sm:$0xff]
        %v288 = vld [vmem:[%s223 + $0x1f0] sm:$0xff]
        %v289 = vld [vmem:[%s223 + $0x1f8] sm:$0xff]
        %v290 = vld [vmem:[%s223 + $0x200] sm:$0xff]
        %v291 = vld [vmem:[%s223 + $0x208] sm:$0xff]
        %v292 = vld [vmem:[%s223 + $0x210] sm:$0xff]
        %v293 = vld [vmem:[%s223 + $0x218] sm:$0xff]
        %v294 = vld [vmem:[%s223 + $0x220] sm:$0xff]
        %v295 = vld [vmem:[%s223 + $0x228] sm:$0xff]
        %v296 = vld [vmem:[%s223 + $0x230] sm:$0xff]
        %v297 = vld [vmem:[%s223 + $0x238] sm:$0xff]
        %v298 = vld [vmem:[%s223 + $0x240] sm:$0xff]
        %v299 = vld [vmem:[%s223 + $0x248] sm:$0xff]
        %v300 = vld [vmem:[%s223 + $0x250] sm:$0xff]
        %v301 = vld [vmem:[%s223 + $0x258] sm:$0xff]
        %v302 = vld [vmem:[%s223 + $0x260] sm:$0xff]
        %v303 = vld [vmem:[%s223 + $0x268] sm:$0xff]
        %v304 = vld [vmem:[%s223 + $0x270] sm:$0xff]
        %v305 = vld [vmem:[%s223 + $0x278] sm:$0xff]
        %v306 = vld [vmem:[%s1] sm:$0xf]
        %v307 = vld [vmem:[%s2] sm:$0x1]
        %v309 = vlaneseq
        %v310 = vshrl.u32 %v309, 7
        %v311 = vsub.s32 0, %v310
        %v312 = vrot.slane %v307, %v311
        %vm314 = vcmask 31744
        %v316 = vsel %vm314, %v226, 0
        %v319 = vsel %vm314, %v227, 0
        %v322 = vsel %vm314, %v228, 0
        %v325 = vsel %vm314, %v229, 0
        %v328 = vsel %vm314, %v230, 0
        %v331 = vsel %vm314, %v231, 0
        %v334 = vsel %vm314, %v232, 0
        %v337 = vsel %vm314, %v233, 0
        %v340 = vsel %vm314, %v234, 0
        %v343 = vsel %vm314, %v235, 0
        %v346 = vsel %vm314, %v236, 0
        %v349 = vsel %vm314, %v237, 0
        %v352 = vsel %vm314, %v238, 0
        %v355 = vsel %vm314, %v239, 0
        %v358 = vsel %vm314, %v240, 0
        %v361 = vsel %vm314, %v241, 0
        %v364 = vsel %vm314, %v242, 0
        %v367 = vsel %vm314, %v243, 0
        %v370 = vsel %vm314, %v244, 0
        %v373 = vsel %vm314, %v245, 0
        %v376 = vsel %vm314, %v246, 0
        %v379 = vsel %vm314, %v247, 0
        %v382 = vsel %vm314, %v248, 0
        %v385 = vsel %vm314, %v249, 0
        %v388 = vsel %vm314, %v250, 0
        %v391 = vsel %vm314, %v251, 0
        %v394 = vsel %vm314, %v252, 0
        %v397 = vsel %vm314, %v253, 0
        %v400 = vsel %vm314, %v254, 0
        %v403 = vsel %vm314, %v255, 0
        %v406 = vsel %vm314, %v256, 0
        %v409 = vsel %vm314, %v257, 0
        %v412 = vsel %vm314, %v258, 0
        %v415 = vsel %vm314, %v259, 0
        %v418 = vsel %vm314, %v260, 0
        %v421 = vsel %vm314, %v261, 0
        %v424 = vsel %vm314, %v262, 0
        %v427 = vsel %vm314, %v263, 0
        %v430 = vsel %vm314, %v264, 0
        %v433 = vsel %vm314, %v265, 0
        %v436 = vsel %vm314, %v266, 0
        %v439 = vsel %vm314, %v267, 0
        %v442 = vsel %vm314, %v268, 0
        %v445 = vsel %vm314, %v269, 0
        %v448 = vsel %vm314, %v270, 0
        %v451 = vsel %vm314, %v271, 0
        %v454 = vsel %vm314, %v272, 0
        %v457 = vsel %vm314, %v273, 0
        %v460 = vsel %vm314, %v274, 0
        %v463 = vsel %vm314, %v275, 0
        %v466 = vsel %vm314, %v276, 0
        %v469 = vsel %vm314, %v277, 0
        %v472 = vsel %vm314, %v278, 0
        %v475 = vsel %vm314, %v279, 0
        %v478 = vsel %vm314, %v280, 0
        %v481 = vsel %vm314, %v281, 0
        %v484 = vsel %vm314, %v282, 0
        %v487 = vsel %vm314, %v283, 0
        %v490 = vsel %vm314, %v284, 0
        %v493 = vsel %vm314, %v285, 0
        %v496 = vsel %vm314, %v286, 0
        %v499 = vsel %vm314, %v287, 0
        %v502 = vsel %vm314, %v288, 0
        %v505 = vsel %vm314, %v289, 0
        %v508 = vsel %vm314, %v290, 0
        %v511 = vsel %vm314, %v291, 0
        %v514 = vsel %vm314, %v292, 0
        %v517 = vsel %vm314, %v293, 0
        %v520 = vsel %vm314, %v294, 0
        %v523 = vsel %vm314, %v295, 0
        %v526 = vsel %vm314, %v296, 0
        %v529 = vsel %vm314, %v297, 0
        %v532 = vsel %vm314, %v298, 0
        %v535 = vsel %vm314, %v299, 0
        %v538 = vsel %vm314, %v300, 0
        %v541 = vsel %vm314, %v301, 0
        %v544 = vsel %vm314, %v302, 0
        %v547 = vsel %vm314, %v303, 0
        %v550 = vsel %vm314, %v304, 0
        %v553 = vsel %vm314, %v305, 0
        %vm555 = vcmask 1043456
        %v557 = vsel %vm555, %v306, 0
        %559 = vmatprep.subr.mxu0 0.0
        %560 = vmatpush1.msra.mxu0 %v557
        %561 = vmatprep.subr.mxu0 0.0
        %562 = vmatpush1.msra.mxu0 0.0
        %563 = vmatprep.subr.mxu0 0.0
        %564 = vmatpush1.msra.mxu0 0.0
        %565 = vmatprep.subr.mxu0 0.0
        %566 = vmatpush1.msra.mxu0 0.0
        %567 = vmatprep.subr.mxu0 0.0
        %568 = vmatpush1.msra.mxu0 0.0
        %569 = vmatprep.subr.mxu0 0.0
        %570 = vmatpush1.msra.mxu0 0.0
        %571 = vmatprep.subr.mxu0 0.0
        %572 = vmatpush1.msra.mxu0 0.0
        %573 = vmatprep.subr.mxu0 0.0
        %574 = vmatpush1.msra.mxu0 0.0
        %575 = vmatprep.subr.mxu0 0.0
        %576 = vmatpush1.msra.mxu0 0.0
        %577 = vmatprep.subr.mxu0 0.0
        %578 = vmatpush1.msra.mxu0 0.0
        %579 = vmatprep.subr.mxu0 0.0
        %580 = vmatpush1.msra.mxu0 0.0
        %581 = vmatprep.subr.mxu0 0.0
        %582 = vmatpush1.msra.mxu0 0.0
        %583 = vmatprep.subr.mxu0 0.0
        %584 = vmatpush1.msra.mxu0 0.0
        %585 = vmatprep.subr.mxu0 0.0
        %586 = vmatpush1.msra.mxu0 0.0
        %587 = vmatprep.subr.mxu0 0.0
        %588 = vmatpush1.msra.mxu0 0.0
        %589 = vmatprep.subr.mxu0 0.0
        %590 = vmatpush1.msra.mxu0 0.0
        %591 = vmatprep.subr.mxu0 0.0
        %592 = vmatpush1.msra.mxu0 0.0
        %593 = vmatprep.subr.mxu0 0.0
        %594 = vmatpush1.msra.mxu0 0.0
        %595 = vmatprep.subr.mxu0 0.0
        %596 = vmatpush1.msra.mxu0 0.0
        %597 = vmatprep.subr.mxu0 0.0
        %598 = vmatpush1.msra.mxu0 0.0
        %599 = vmatprep.subr.mxu0 0.0
        %600 = vmatpush1.msra.mxu0 0.0
        %601 = vmatprep.subr.mxu0 0.0
        %602 = vmatpush1.msra.mxu0 0.0
        %603 = vmatprep.subr.mxu0 0.0
        %604 = vmatpush1.msra.mxu0 0.0
        %605 = vmatprep.subr.mxu0 0.0
        %606 = vmatpush1.msra.mxu0 0.0
        %607 = vmatprep.subr.mxu0 0.0
        %608 = vmatpush1.msra.mxu0 0.0
        %609 = vmatprep.subr.mxu0 0.0
        %610 = vmatpush1.msra.mxu0 0.0
        %611 = vmatprep.subr.mxu0 0.0
        %612 = vmatpush1.msra.mxu0 0.0
        %613 = vmatprep.subr.mxu0 0.0
        %614 = vmatpush1.msra.mxu0 0.0
        %615 = vmatprep.subr.mxu0 0.0
        %616 = vmatpush1.msra.mxu0 0.0
        %617 = vmatprep.subr.mxu0 0.0
        %618 = vmatpush1.msra.mxu0 0.0
        %619 = vmatprep.subr.mxu0 0.0
        %620 = vmatpush1.msra.mxu0 0.0
        %621 = vmatprep.subr.mxu0 0.0
        %622 = vmatpush1.msra.mxu0 0.0
        %623 = vmatprep.mubr.f32.mxu0 0.0
        %624 = vmatmul.mubr.f32.gmra.mrb[0].mxu0 %v316
        %v625 = vpop.f32.mrb[0].mxu0
        %v626 = vadd.f32 %v312, %v625
        %v627 = vpop.f32.mrb[0].mxu0
        %628 = vmatprep.mubr.f32.mxu0 0.0
        %629 = vmatmul.mubr.f32.gmra.mrb[0].mxu0 %v319
        %v630 = vpop.f32.mrb[0].mxu0
        %v631 = vadd.f32 %v312, %v630
        %v632 = vpop.f32.mrb[0].mxu0
        %633 = vmatprep.mubr.f32.mxu0 0.0
        %634 = vmatmul.mubr.f32.gmra.mrb[0].mxu0 %v322
        %v635 = vpop.f32.mrb[0].mxu0
        %v636 = vadd.f32 %v312, %v635
        %v637 = vpop.f32.mrb[0].mxu0
        %638 = vmatprep.mubr.f32.mxu0 0.0
        %639 = vmatmul.mubr.f32.gmra.mrb[0].mxu0 %v325
        %v640 = vpop.f32.mrb[0].mxu0
        %v641 = vadd.f32 %v312, %v640
        %v642 = vpop.f32.mrb[0].mxu0
        %643 = vmatprep.mubr.f32.mxu0 0.0
        %644 = vmatmul.mubr.f32.gmra.mrb[0].mxu0 %v328
        %v645 = vpop.f32.mrb[0].mxu0
        %v646 = vadd.f32 %v312, %v645
        %v647 = vpop.f32.mrb[0].mxu0
        %648 = vmatprep.mubr.f32.mxu0 0.0
        %649 = vmatmul.mubr.f32.gmra.mrb[0].mxu0 %v331
        %v650 = vpop.f32.mrb[0].mxu0
        %v651 = vadd.f32 %v312, %v650
        %v652 = vpop.f32.mrb[0].mxu0
        %653 = vmatprep.mubr.f32.mxu0 0.0
        %654 = vmatmul.mubr.f32.gmra.mrb[0].mxu0 %v334
        %v655 = vpop.f32.mrb[0].mxu0
        %v656 = vadd.f32 %v312, %v655
        %v657 = vpop.f32.mrb[0].mxu0
        %658 = vmatprep.mubr.f32.mxu0 0.0
        %659 = vmatmul.mubr.f32.gmra.mrb[0].mxu0 %v337
        %v660 = vpop.f32.mrb[0].mxu0
        %v661 = vadd.f32 %v312, %v660
        %v662 = vpop.f32.mrb[0].mxu0
        %663 = vmatprep.mubr.f32.mxu0 0.0
        %664 = vmatmul.mubr.f32.gmra.mrb[0].mxu0 %v340
        %v665 = vpop.f32.mrb[0].mxu0
        %v666 = vadd.f32 %v312, %v665
        %v667 = vpop.f32.mrb[0].mxu0
        %668 = vmatprep.mubr.f32.mxu0 0.0
        %669 = vmatmul.mubr.f32.gmra.mrb[0].mxu0 %v343
        %v670 = vpop.f32.mrb[0].mxu0
        %v671 = vadd.f32 %v312, %v670
        %v672 = vpop.f32.mrb[0].mxu0
        %673 = vmatprep.mubr.f32.mxu0 0.0
        %674 = vmatmul.mubr.f32.gmra.mrb[0].mxu0 %v346
        %v675 = vpop.f32.mrb[0].mxu0
        %v676 = vadd.f32 %v312, %v675
        %v677 = vpop.f32.mrb[0].mxu0
        %678 = vmatprep.mubr.f32.mxu0 0.0
        %679 = vmatmul.mubr.f32.gmra.mrb[0].mxu0 %v349
        %v680 = vpop.f32.mrb[0].mxu0
        %v681 = vadd.f32 %v312, %v680
        %v682 = vpop.f32.mrb[0].mxu0
        %683 = vmatprep.mubr.f32.mxu0 0.0
        %684 = vmatmul.mubr.f32.gmra.mrb[0].mxu0 %v352
        %v685 = vpop.f32.mrb[0].mxu0
        %v686 = vadd.f32 %v312, %v685
        %v687 = vpop.f32.mrb[0].mxu0
        %688 = vmatprep.mubr.f32.mxu0 0.0
        %689 = vmatmul.mubr.f32.gmra.mrb[0].mxu0 %v355
        %v690 = vpop.f32.mrb[0].mxu0
        %v691 = vadd.f32 %v312, %v690
        %v692 = vpop.f32.mrb[0].mxu0
        %693 = vmatprep.mubr.f32.mxu0 0.0
        %694 = vmatmul.mubr.f32.gmra.mrb[0].mxu0 %v358
        %v695 = vpop.f32.mrb[0].mxu0
        %v696 = vadd.f32 %v312, %v695
        %v697 = vpop.f32.mrb[0].mxu0
        %698 = vmatprep.mubr.f32.mxu0 0.0
        %699 = vmatmul.mubr.f32.gmra.mrb[0].mxu0 %v361
        %v700 = vpop.f32.mrb[0].mxu0
        %v701 = vadd.f32 %v312, %v700
        %v702 = vpop.f32.mrb[0].mxu0
        %703 = vmatprep.mubr.f32.mxu0 0.0
        %704 = vmatmul.mubr.f32.gmra.mrb[0].mxu0 %v364
        %v705 = vpop.f32.mrb[0].mxu0
        %v706 = vadd.f32 %v312, %v705
        %v707 = vpop.f32.mrb[0].mxu0
        %708 = vmatprep.mubr.f32.mxu0 0.0
        %709 = vmatmul.mubr.f32.gmra.mrb[0].mxu0 %v367
        %v710 = vpop.f32.mrb[0].mxu0
        %v711 = vadd.f32 %v312, %v710
        %v712 = vpop.f32.mrb[0].mxu0
        %713 = vmatprep.mubr.f32.mxu0 0.0
        %714 = vmatmul.mubr.f32.gmra.mrb[0].mxu0 %v370
        %v715 = vpop.f32.mrb[0].mxu0
        %v716 = vadd.f32 %v312, %v715
        %v717 = vpop.f32.mrb[0].mxu0
        %718 = vmatprep.mubr.f32.mxu0 0.0
        %719 = vmatmul.mubr.f32.gmra.mrb[0].mxu0 %v373
        %v720 = vpop.f32.mrb[0].mxu0
        %v721 = vadd.f32 %v312, %v720
        %v722 = vpop.f32.mrb[0].mxu0
        %723 = vmatprep.mubr.f32.mxu0 0.0
        %724 = vmatmul.mubr.f32.gmra.mrb[0].mxu0 %v376
        %v725 = vpop.f32.mrb[0].mxu0
        %v726 = vadd.f32 %v312, %v725
        %v727 = vpop.f32.mrb[0].mxu0
        %728 = vmatprep.mubr.f32.mxu0 0.0
        %729 = vmatmul.mubr.f32.gmra.mrb[0].mxu0 %v379
        %v730 = vpop.f32.mrb[0].mxu0
        %v731 = vadd.f32 %v312, %v730
        %v732 = vpop.f32.mrb[0].mxu0
        %733 = vmatprep.mubr.f32.mxu0 0.0
        %734 = vmatmul.mubr.f32.gmra.mrb[0].mxu0 %v382
        %v735 = vpop.f32.mrb[0].mxu0
        %v736 = vadd.f32 %v312, %v735
        %v737 = vpop.f32.mrb[0].mxu0
        %738 = vmatprep.mubr.f32.mxu0 0.0
        %739 = vmatmul.mubr.f32.gmra.mrb[0].mxu0 %v385
        %v740 = vpop.f32.mrb[0].mxu0
        %v741 = vadd.f32 %v312, %v740
        %v742 = vpop.f32.mrb[0].mxu0
        %743 = vmatprep.mubr.f32.mxu0 0.0
        %744 = vmatmul.mubr.f32.gmra.mrb[0].mxu0 %v388
        %v745 = vpop.f32.mrb[0].mxu0
        %v746 = vadd.f32 %v312, %v745
        %v747 = vpop.f32.mrb[0].mxu0
        %748 = vmatprep.mubr.f32.mxu0 0.0
        %749 = vmatmul.mubr.f32.gmra.mrb[0].mxu0 %v391
        %v750 = vpop.f32.mrb[0].mxu0
        %v751 = vadd.f32 %v312, %v750
        %v752 = vpop.f32.mrb[0].mxu0
        %753 = vmatprep.mubr.f32.mxu0 0.0
        %754 = vmatmul.mubr.f32.gmra.mrb[0].mxu0 %v394
        %v755 = vpop.f32.mrb[0].mxu0
        %v756 = vadd.f32 %v312, %v755
        %v757 = vpop.f32.mrb[0].mxu0
        %758 = vmatprep.mubr.f32.mxu0 0.0
        %759 = vmatmul.mubr.f32.gmra.mrb[0].mxu0 %v397
        %v760 = vpop.f32.mrb[0].mxu0
        %v761 = vadd.f32 %v312, %v760
        %v762 = vpop.f32.mrb[0].mxu0
        %763 = vmatprep.mubr.f32.mxu0 0.0
        %764 = vmatmul.mubr.f32.gmra.mrb[0].mxu0 %v400
        %v765 = vpop.f32.mrb[0].mxu0
        %v766 = vadd.f32 %v312, %v765
        %v767 = vpop.f32.mrb[0].mxu0
        %768 = vmatprep.mubr.f32.mxu0 0.0
        %769 = vmatmul.mubr.f32.gmra.mrb[0].mxu0 %v403
        %v770 = vpop.f32.mrb[0].mxu0
        %v771 = vadd.f32 %v312, %v770
        %v772 = vpop.f32.mrb[0].mxu0
        %773 = vmatprep.mubr.f32.mxu0 0.0
        %774 = vmatmul.mubr.f32.gmra.mrb[0].mxu0 %v406
        %v775 = vpop.f32.mrb[0].mxu0
        %v776 = vadd.f32 %v312, %v775
        %v777 = vpop.f32.mrb[0].mxu0
        %778 = vmatprep.mubr.f32.mxu0 0.0
        %779 = vmatmul.mubr.f32.gmra.mrb[0].mxu0 %v409
        %v780 = vpop.f32.mrb[0].mxu0
        %v781 = vadd.f32 %v312, %v780
        %v782 = vpop.f32.mrb[0].mxu0
        %783 = vmatprep.mubr.f32.mxu0 0.0
        %784 = vmatmul.mubr.f32.gmra.mrb[0].mxu0 %v412
        %v785 = vpop.f32.mrb[0].mxu0
        %v786 = vadd.f32 %v312, %v785
        %v787 = vpop.f32.mrb[0].mxu0
        %788 = vmatprep.mubr.f32.mxu0 0.0
        %789 = vmatmul.mubr.f32.gmra.mrb[0].mxu0 %v415
        %v790 = vpop.f32.mrb[0].mxu0
        %v791 = vadd.f32 %v312, %v790
        %v792 = vpop.f32.mrb[0].mxu0
        %793 = vmatprep.mubr.f32.mxu0 0.0
        %794 = vmatmul.mubr.f32.gmra.mrb[0].mxu0 %v418
        %v795 = vpop.f32.mrb[0].mxu0
        %v796 = vadd.f32 %v312, %v795
        %v797 = vpop.f32.mrb[0].mxu0
        %798 = vmatprep.mubr.f32.mxu0 0.0
        %799 = vmatmul.mubr.f32.gmra.mrb[0].mxu0 %v421
        %v800 = vpop.f32.mrb[0].mxu0
        %v801 = vadd.f32 %v312, %v800
        %v802 = vpop.f32.mrb[0].mxu0
        %803 = vmatprep.mubr.f32.mxu0 0.0
        %804 = vmatmul.mubr.f32.gmra.mrb[0].mxu0 %v424
        %v805 = vpop.f32.mrb[0].mxu0
        %v806 = vadd.f32 %v312, %v805
        %v807 = vpop.f32.mrb[0].mxu0
        %808 = vmatprep.mubr.f32.mxu0 0.0
        %809 = vmatmul.mubr.f32.gmra.mrb[0].mxu0 %v427
        %v810 = vpop.f32.mrb[0].mxu0
        %v811 = vadd.f32 %v312, %v810
        %v812 = vpop.f32.mrb[0].mxu0
        %813 = vmatprep.mubr.f32.mxu0 0.0
        %814 = vmatmul.mubr.f32.gmra.mrb[0].mxu0 %v430
        %v815 = vpop.f32.mrb[0].mxu0
        %v816 = vadd.f32 %v312, %v815
        %v817 = vpop.f32.mrb[0].mxu0
        %818 = vmatprep.mubr.f32.mxu0 0.0
        %819 = vmatmul.mubr.f32.gmra.mrb[0].mxu0 %v433
        %v820 = vpop.f32.mrb[0].mxu0
        %v821 = vadd.f32 %v312, %v820
        %v822 = vpop.f32.mrb[0].mxu0
        %823 = vmatprep.mubr.f32.mxu0 0.0
        %824 = vmatmul.mubr.f32.gmra.mrb[0].mxu0 %v436
        %v825 = vpop.f32.mrb[0].mxu0
        %v826 = vadd.f32 %v312, %v825
        %v827 = vpop.f32.mrb[0].mxu0
        %828 = vmatprep.mubr.f32.mxu0 0.0
        %829 = vmatmul.mubr.f32.gmra.mrb[0].mxu0 %v439
        %v830 = vpop.f32.mrb[0].mxu0
        %v831 = vadd.f32 %v312, %v830
        %v832 = vpop.f32.mrb[0].mxu0
        %833 = vmatprep.mubr.f32.mxu0 0.0
        %834 = vmatmul.mubr.f32.gmra.mrb[0].mxu0 %v442
        %v835 = vpop.f32.mrb[0].mxu0
        %v836 = vadd.f32 %v312, %v835
        %v837 = vpop.f32.mrb[0].mxu0
        %838 = vmatprep.mubr.f32.mxu0 0.0
        %839 = vmatmul.mubr.f32.gmra.mrb[0].mxu0 %v445
        %v840 = vpop.f32.mrb[0].mxu0
        %v841 = vadd.f32 %v312, %v840
        %v842 = vpop.f32.mrb[0].mxu0
        %843 = vmatprep.mubr.f32.mxu0 0.0
        %844 = vmatmul.mubr.f32.gmra.mrb[0].mxu0 %v448
        %v845 = vpop.f32.mrb[0].mxu0
        %v846 = vadd.f32 %v312, %v845
        %v847 = vpop.f32.mrb[0].mxu0
        %848 = vmatprep.mubr.f32.mxu0 0.0
        %849 = vmatmul.mubr.f32.gmra.mrb[0].mxu0 %v451
        %v850 = vpop.f32.mrb[0].mxu0
        %v851 = vadd.f32 %v312, %v850
        %v852 = vpop.f32.mrb[0].mxu0
        %853 = vmatprep.mubr.f32.mxu0 0.0
        %854 = vmatmul.mubr.f32.gmra.mrb[0].mxu0 %v454
        %v855 = vpop.f32.mrb[0].mxu0
        %v856 = vadd.f32 %v312, %v855
        %v857 = vpop.f32.mrb[0].mxu0
        %858 = vmatprep.mubr.f32.mxu0 0.0
        %859 = vmatmul.mubr.f32.gmra.mrb[0].mxu0 %v457
        %v860 = vpop.f32.mrb[0].mxu0
        %v861 = vadd.f32 %v312, %v860
        %v862 = vpop.f32.mrb[0].mxu0
        %863 = vmatprep.mubr.f32.mxu0 0.0
        %864 = vmatmul.mubr.f32.gmra.mrb[0].mxu0 %v460
        %v865 = vpop.f32.mrb[0].mxu0
        %v866 = vadd.f32 %v312, %v865
        %v867 = vpop.f32.mrb[0].mxu0
        %868 = vmatprep.mubr.f32.mxu0 0.0
        %869 = vmatmul.mubr.f32.gmra.mrb[0].mxu0 %v463
        %v870 = vpop.f32.mrb[0].mxu0
        %v871 = vadd.f32 %v312, %v870
        %v872 = vpop.f32.mrb[0].mxu0
        %873 = vmatprep.mubr.f32.mxu0 0.0
        %874 = vmatmul.mubr.f32.gmra.mrb[0].mxu0 %v466
        %v875 = vpop.f32.mrb[0].mxu0
        %v876 = vadd.f32 %v312, %v875
        %v877 = vpop.f32.mrb[0].mxu0
        %878 = vmatprep.mubr.f32.mxu0 0.0
        %879 = vmatmul.mubr.f32.gmra.mrb[0].mxu0 %v469
        %v880 = vpop.f32.mrb[0].mxu0
        %v881 = vadd.f32 %v312, %v880
        %v882 = vpop.f32.mrb[0].mxu0
        %883 = vmatprep.mubr.f32.mxu0 0.0
        %884 = vmatmul.mubr.f32.gmra.mrb[0].mxu0 %v472
        %v885 = vpop.f32.mrb[0].mxu0
        %v886 = vadd.f32 %v312, %v885
        %v887 = vpop.f32.mrb[0].mxu0
        %888 = vmatprep.mubr.f32.mxu0 0.0
        %889 = vmatmul.mubr.f32.gmra.mrb[0].mxu0 %v475
        %v890 = vpop.f32.mrb[0].mxu0
        %v891 = vadd.f32 %v312, %v890
        %v892 = vpop.f32.mrb[0].mxu0
        %893 = vmatprep.mubr.f32.mxu0 0.0
        %894 = vmatmul.mubr.f32.gmra.mrb[0].mxu0 %v478
        %v895 = vpop.f32.mrb[0].mxu0
        %v896 = vadd.f32 %v312, %v895
        %v897 = vpop.f32.mrb[0].mxu0
        %898 = vmatprep.mubr.f32.mxu0 0.0
        %899 = vmatmul.mubr.f32.gmra.mrb[0].mxu0 %v481
        %v900 = vpop.f32.mrb[0].mxu0
        %v901 = vadd.f32 %v312, %v900
        %v902 = vpop.f32.mrb[0].mxu0
        %903 = vmatprep.mubr.f32.mxu0 0.0
        %904 = vmatmul.mubr.f32.gmra.mrb[0].mxu0 %v484
        %v905 = vpop.f32.mrb[0].mxu0
        %v906 = vadd.f32 %v312, %v905
        %v907 = vpop.f32.mrb[0].mxu0
        %908 = vmatprep.mubr.f32.mxu0 0.0
        %909 = vmatmul.mubr.f32.gmra.mrb[0].mxu0 %v487
        %v910 = vpop.f32.mrb[0].mxu0
        %v911 = vadd.f32 %v312, %v910
        %v912 = vpop.f32.mrb[0].mxu0
        %913 = vmatprep.mubr.f32.mxu0 0.0
        %914 = vmatmul.mubr.f32.gmra.mrb[0].mxu0 %v490
        %v915 = vpop.f32.mrb[0].mxu0
        %v916 = vadd.f32 %v312, %v915
        %v917 = vpop.f32.mrb[0].mxu0
        %918 = vmatprep.mubr.f32.mxu0 0.0
        %919 = vmatmul.mubr.f32.gmra.mrb[0].mxu0 %v493
        %v920 = vpop.f32.mrb[0].mxu0
        %v921 = vadd.f32 %v312, %v920
        %v922 = vpop.f32.mrb[0].mxu0
        %923 = vmatprep.mubr.f32.mxu0 0.0
        %924 = vmatmul.mubr.f32.gmra.mrb[0].mxu0 %v496
        %v925 = vpop.f32.mrb[0].mxu0
        %v926 = vadd.f32 %v312, %v925
        %v927 = vpop.f32.mrb[0].mxu0
        %928 = vmatprep.mubr.f32.mxu0 0.0
        %929 = vmatmul.mubr.f32.gmra.mrb[0].mxu0 %v499
        %v930 = vpop.f32.mrb[0].mxu0
        %v931 = vadd.f32 %v312, %v930
        %v932 = vpop.f32.mrb[0].mxu0
        %933 = vmatprep.mubr.f32.mxu0 0.0
        %934 = vmatmul.mubr.f32.gmra.mrb[0].mxu0 %v502
        %v935 = vpop.f32.mrb[0].mxu0
        %v936 = vadd.f32 %v312, %v935
        %v937 = vpop.f32.mrb[0].mxu0
        %938 = vmatprep.mubr.f32.mxu0 0.0
        %939 = vmatmul.mubr.f32.gmra.mrb[0].mxu0 %v505
        %v940 = vpop.f32.mrb[0].mxu0
        %v941 = vadd.f32 %v312, %v940
        %v942 = vpop.f32.mrb[0].mxu0
        %943 = vmatprep.mubr.f32.mxu0 0.0
        %944 = vmatmul.mubr.f32.gmra.mrb[0].mxu0 %v508
        %v945 = vpop.f32.mrb[0].mxu0
        %v946 = vadd.f32 %v312, %v945
        %v947 = vpop.f32.mrb[0].mxu0
        %948 = vmatprep.mubr.f32.mxu0 0.0
        %949 = vmatmul.mubr.f32.gmra.mrb[0].mxu0 %v511
        %v950 = vpop.f32.mrb[0].mxu0
        %v951 = vadd.f32 %v312, %v950
        %v952 = vpop.f32.mrb[0].mxu0
        %953 = vmatprep.mubr.f32.mxu0 0.0
        %954 = vmatmul.mubr.f32.gmra.mrb[0].mxu0 %v514
        %v955 = vpop.f32.mrb[0].mxu0
        %v956 = vadd.f32 %v312, %v955
        %v957 = vpop.f32.mrb[0].mxu0
        %958 = vmatprep.mubr.f32.mxu0 0.0
        %959 = vmatmul.mubr.f32.gmra.mrb[0].mxu0 %v517
        %v960 = vpop.f32.mrb[0].mxu0
        %v961 = vadd.f32 %v312, %v960
        %v962 = vpop.f32.mrb[0].mxu0
        %963 = vmatprep.mubr.f32.mxu0 0.0
        %964 = vmatmul.mubr.f32.gmra.mrb[0].mxu0 %v520
        %v965 = vpop.f32.mrb[0].mxu0
        %v966 = vadd.f32 %v312, %v965
        %v967 = vpop.f32.mrb[0].mxu0
        %968 = vmatprep.mubr.f32.mxu0 0.0
        %969 = vmatmul.mubr.f32.gmra.mrb[0].mxu0 %v523
        %v970 = vpop.f32.mrb[0].mxu0
        %v971 = vadd.f32 %v312, %v970
        %v972 = vpop.f32.mrb[0].mxu0
        %973 = vmatprep.mubr.f32.mxu0 0.0
        %974 = vmatmul.mubr.f32.gmra.mrb[0].mxu0 %v526
        %v975 = vpop.f32.mrb[0].mxu0
        %v976 = vadd.f32 %v312, %v975
        %v977 = vpop.f32.mrb[0].mxu0
        %978 = vmatprep.mubr.f32.mxu0 0.0
        %979 = vmatmul.mubr.f32.gmra.mrb[0].mxu0 %v529
        %v980 = vpop.f32.mrb[0].mxu0
        %v981 = vadd.f32 %v312, %v980
        %v982 = vpop.f32.mrb[0].mxu0
        %983 = vmatprep.mubr.f32.mxu0 0.0
        %984 = vmatmul.mubr.f32.gmra.mrb[0].mxu0 %v532
        %v985 = vpop.f32.mrb[0].mxu0
        %v986 = vadd.f32 %v312, %v985
        %v987 = vpop.f32.mrb[0].mxu0
        %988 = vmatprep.mubr.f32.mxu0 0.0
        %989 = vmatmul.mubr.f32.gmra.mrb[0].mxu0 %v535
        %v990 = vpop.f32.mrb[0].mxu0
        %v991 = vadd.f32 %v312, %v990
        %v992 = vpop.f32.mrb[0].mxu0
        %993 = vmatprep.mubr.f32.mxu0 0.0
        %994 = vmatmul.mubr.f32.gmra.mrb[0].mxu0 %v538
        %v995 = vpop.f32.mrb[0].mxu0
        %v996 = vadd.f32 %v312, %v995
        %v997 = vpop.f32.mrb[0].mxu0
        %998 = vmatprep.mubr.f32.mxu0 0.0
        %999 = vmatmul.mubr.f32.gmra.mrb[0].mxu0 %v541
        %v1000 = vpop.f32.mrb[0].mxu0
        %v1001 = vadd.f32 %v312, %v1000
        %v1002 = vpop.f32.mrb[0].mxu0
        %1003 = vmatprep.mubr.f32.mxu0 0.0
        %1004 = vmatmul.mubr.f32.gmra.mrb[0].mxu0 %v544
        %v1005 = vpop.f32.mrb[0].mxu0
        %v1006 = vadd.f32 %v312, %v1005
        %v1007 = vpop.f32.mrb[0].mxu0
        %1008 = vmatprep.mubr.f32.mxu0 0.0
        %1009 = vmatmul.mubr.f32.gmra.mrb[0].mxu0 %v547
        %v1010 = vpop.f32.mrb[0].mxu0
        %v1011 = vadd.f32 %v312, %v1010
        %v1012 = vpop.f32.mrb[0].mxu0
        %1013 = vmatprep.mubr.f32.mxu0 0.0
        %1014 = vmatmul.mubr.f32.gmra.mrb[0].mxu0 %v550
        %v1015 = vpop.f32.mrb[0].mxu0
        %v1016 = vadd.f32 %v312, %v1015
        %v1017 = vpop.f32.mrb[0].mxu0
        %1018 = vmatprep.mubr.f32.mxu0 0.0
        %1019 = vmatmul.mubr.f32.gmra.mrb[0].mxu0 %v553
        %v1020 = vpop.f32.mrb[0].mxu0
        %v1021 = vadd.f32 %v312, %v1020
        %v1022 = vpop.f32.mrb[0].mxu0
        %1023 = vdwg.mxu0
        %v1024 = vmax.f32 %v626, 0.0
        %v1025 = vmax.f32 %v631, 0.0
        %v1026 = vmax.f32 %v636, 0.0
        %v1027 = vmax.f32 %v641, 0.0
        %v1028 = vmax.f32 %v646, 0.0
        %v1029 = vmax.f32 %v651, 0.0
        %v1030 = vmax.f32 %v656, 0.0
        %v1031 = vmax.f32 %v661, 0.0
        %v1032 = vmax.f32 %v666, 0.0
        %v1033 = vmax.f32 %v671, 0.0
        %v1034 = vmax.f32 %v676, 0.0
        %v1035 = vmax.f32 %v681, 0.0
        %v1036 = vmax.f32 %v686, 0.0
        %v1037 = vmax.f32 %v691, 0.0
        %v1038 = vmax.f32 %v696, 0.0
        %v1039 = vmax.f32 %v701, 0.0
        %v1040 = vmax.f32 %v706, 0.0
        %v1041 = vmax.f32 %v711, 0.0
        %v1042 = vmax.f32 %v716, 0.0
        %v1043 = vmax.f32 %v721, 0.0
        %v1044 = vmax.f32 %v726, 0.0
        %v1045 = vmax.f32 %v731, 0.0
        %v1046 = vmax.f32 %v736, 0.0
        %v1047 = vmax.f32 %v741, 0.0
        %v1048 = vmax.f32 %v746, 0.0
        %v1049 = vmax.f32 %v751, 0.0
        %v1050 = vmax.f32 %v756, 0.0
        %v1051 = vmax.f32 %v761, 0.0
        %v1052 = vmax.f32 %v766, 0.0
        %v1053 = vmax.f32 %v771, 0.0
        %v1054 = vmax.f32 %v776, 0.0
        %v1055 = vmax.f32 %v781, 0.0
        %v1056 = vmax.f32 %v786, 0.0
        %v1057 = vmax.f32 %v791, 0.0
        %v1058 = vmax.f32 %v796, 0.0
        %v1059 = vmax.f32 %v801, 0.0
        %v1060 = vmax.f32 %v806, 0.0
        %v1061 = vmax.f32 %v811, 0.0
        %v1062 = vmax.f32 %v816, 0.0
        %v1063 = vmax.f32 %v821, 0.0
        %v1064 = vmax.f32 %v826, 0.0
        %v1065 = vmax.f32 %v831, 0.0
        %v1066 = vmax.f32 %v836, 0.0
        %v1067 = vmax.f32 %v841, 0.0
        %v1068 = vmax.f32 %v846, 0.0
        %v1069 = vmax.f32 %v851, 0.0
        %v1070 = vmax.f32 %v856, 0.0
        %v1071 = vmax.f32 %v861, 0.0
        %v1072 = vmax.f32 %v866, 0.0
        %v1073 = vmax.f32 %v871, 0.0
        %v1074 = vmax.f32 %v876, 0.0
        %v1075 = vmax.f32 %v881, 0.0
        %v1076 = vmax.f32 %v886, 0.0
        %v1077 = vmax.f32 %v891, 0.0
        %v1078 = vmax.f32 %v896, 0.0
        %v1079 = vmax.f32 %v901, 0.0
        %v1080 = vmax.f32 %v906, 0.0
        %v1081 = vmax.f32 %v911, 0.0
        %v1082 = vmax.f32 %v916, 0.0
        %v1083 = vmax.f32 %v921, 0.0
        %v1084 = vmax.f32 %v926, 0.0
        %v1085 = vmax.f32 %v931, 0.0
        %v1086 = vmax.f32 %v936, 0.0
        %v1087 = vmax.f32 %v941, 0.0
        %v1088 = vmax.f32 %v946, 0.0
        %v1089 = vmax.f32 %v951, 0.0
        %v1090 = vmax.f32 %v956, 0.0
        %v1091 = vmax.f32 %v961, 0.0
        %v1092 = vmax.f32 %v966, 0.0
        %v1093 = vmax.f32 %v971, 0.0
        %v1094 = vmax.f32 %v976, 0.0
        %v1095 = vmax.f32 %v981, 0.0
        %v1096 = vmax.f32 %v986, 0.0
        %v1097 = vmax.f32 %v991, 0.0
        %v1098 = vmax.f32 %v996, 0.0
        %v1099 = vmax.f32 %v1001, 0.0
        %v1100 = vmax.f32 %v1006, 0.0
        %v1101 = vmax.f32 %v1011, 0.0
        %v1102 = vmax.f32 %v1016, 0.0
        %v1103 = vmax.f32 %v1021, 0.0
        %v1104 = vld [vmem:[%s3] sm:$0xff]
        %v1105 = vld [vmem:[%s3 + $0x8] sm:$0xff]
        %v1106 = vld [vmem:[%s3 + $0x10] sm:$0xff]
        %v1107 = vld [vmem:[%s3 + $0x18] sm:$0xff]
        %v1108 = vld [vmem:[%s3 + $0x20] sm:$0xff]
        %v1109 = vld [vmem:[%s3 + $0x28] sm:$0xff]
        %v1110 = vld [vmem:[%s3 + $0x30] sm:$0xff]
        %v1111 = vld [vmem:[%s3 + $0x38] sm:$0xff]
        %v1112 = vld [vmem:[%s3 + $0x40] sm:$0xff]
        %v1113 = vld [vmem:[%s3 + $0x48] sm:$0xff]
        %v1114 = vld [vmem:[%s3 + $0x50] sm:$0xff]
        %v1115 = vld [vmem:[%s3 + $0x58] sm:$0xff]
        %v1116 = vld [vmem:[%s3 + $0x60] sm:$0xff]
        %v1117 = vld [vmem:[%s3 + $0x68] sm:$0xff]
        %v1118 = vld [vmem:[%s3 + $0x70] sm:$0xff]
        %v1119 = vld [vmem:[%s3 + $0x78] sm:$0xff]
        %v1120 = vld [vmem:[%s4] sm:$0x1]
        %v1122 = vlaneseq
        %v1123 = vshrl.u32 %v1122, 7
        %v1124 = vsub.s32 0, %v1123
        %v1125 = vrot.slane %v1120, %v1124
        %1127 = vmatprep.subr.mxu0 0.0
        %1128 = vmatpush1.msra.mxu0 %v1104
        %1129 = vmatprep.subr.mxu0 0.0
        %1130 = vmatpush1.msra.mxu0 %v1105
        %1131 = vmatprep.subr.mxu0 0.0
        %1132 = vmatpush1.msra.mxu0 %v1106
        %1133 = vmatprep.subr.mxu0 0.0
        %1134 = vmatpush1.msra.mxu0 %v1107
        %1135 = vmatprep.subr.mxu0 0.0
        %1136 = vmatpush1.msra.mxu0 %v1108
        %1137 = vmatprep.subr.mxu0 0.0
        %1138 = vmatpush1.msra.mxu0 %v1109
        %1139 = vmatprep.subr.mxu0 0.0
        %1140 = vmatpush1.msra.mxu0 %v1110
        %1141 = vmatprep.subr.mxu0 0.0
        %1142 = vmatpush1.msra.mxu0 %v1111
        %1143 = vmatprep.subr.mxu0 0.0
        %1144 = vmatpush1.msra.mxu0 %v1112
        %1145 = vmatprep.subr.mxu0 0.0
        %1146 = vmatpush1.msra.mxu0 %v1113
        %1147 = vmatprep.subr.mxu0 0.0
        %1148 = vmatpush1.msra.mxu0 %v1114
        %1149 = vmatprep.subr.mxu0 0.0
        %1150 = vmatpush1.msra.mxu0 %v1115
        %1151 = vmatprep.subr.mxu0 0.0
        %1152 = vmatpush1.msra.mxu0 %v1116
        %1153 = vmatprep.subr.mxu0 0.0
        %1154 = vmatpush1.msra.mxu0 %v1117
        %1155 = vmatprep.subr.mxu0 0.0
        %1156 = vmatpush1.msra.mxu0 %v1118
        %1157 = vmatprep.subr.mxu0 0.0
        %1158 = vmatpush1.msra.mxu0 %v1119
        %1159 = vmatprep.subr.mxu0 0.0
        %1160 = vmatpush1.msra.mxu0 0.0
        %1161 = vmatprep.subr.mxu0 0.0
        %1162 = vmatpush1.msra.mxu0 0.0
        %1163 = vmatprep.subr.mxu0 0.0
        %1164 = vmatpush1.msra.mxu0 0.0
        %1165 = vmatprep.subr.mxu0 0.0
        %1166 = vmatpush1.msra.mxu0 0.0
        %1167 = vmatprep.subr.mxu0 0.0
        %1168 = vmatpush1.msra.mxu0 0.0
        %1169 = vmatprep.subr.mxu0 0.0
        %1170 = vmatpush1.msra.mxu0 0.0
        %1171 = vmatprep.subr.mxu0 0.0
        %1172 = vmatpush1.msra.mxu0 0.0
        %1173 = vmatprep.subr.mxu0 0.0
        %1174 = vmatpush1.msra.mxu0 0.0
        %1175 = vmatprep.subr.mxu0 0.0
        %1176 = vmatpush1.msra.mxu0 0.0
        %1177 = vmatprep.subr.mxu0 0.0
        %1178 = vmatpush1.msra.mxu0 0.0
        %1179 = vmatprep.subr.mxu0 0.0
        %1180 = vmatpush1.msra.mxu0 0.0
        %1181 = vmatprep.subr.mxu0 0.0
        %1182 = vmatpush1.msra.mxu0 0.0
        %1183 = vmatprep.subr.mxu0 0.0
        %1184 = vmatpush1.msra.mxu0 0.0
        %1185 = vmatprep.subr.mxu0 0.0
        %1186 = vmatpush1.msra.mxu0 0.0
        %1187 = vmatprep.subr.mxu0 0.0
        %1188 = vmatpush1.msra.mxu0 0.0
        %1189 = vmatprep.subr.mxu0 0.0
        %1190 = vmatpush1.msra.mxu0 0.0
        %1191 = vmatprep.mubr.f32.mxu0 0.0
        %1192 = vmatmul.mubr.f32.gmra.mrb[0].mxu0 %v1024
        %v1193 = vpop.f32.mrb[0].mxu0
        %v1194 = vadd.f32 %v1125, %v1193
        %v1195 = vpop.f32.mrb[0].mxu0
        %1196 = vmatprep.mubr.f32.mxu0 0.0
        %1197 = vmatmul.mubr.f32.gmra.mrb[0].mxu0 %v1025
        %v1198 = vpop.f32.mrb[0].mxu0
        %v1199 = vadd.f32 %v1125, %v1198
        %v1200 = vpop.f32.mrb[0].mxu0
        %1201 = vmatprep.mubr.f32.mxu0 0.0
        %1202 = vmatmul.mubr.f32.gmra.mrb[0].mxu0 %v1026
        %v1203 = vpop.f32.mrb[0].mxu0
        %v1204 = vadd.f32 %v1125, %v1203
        %v1205 = vpop.f32.mrb[0].mxu0
        %1206 = vmatprep.mubr.f32.mxu0 0.0
        %1207 = vmatmul.mubr.f32.gmra.mrb[0].mxu0 %v1027
        %v1208 = vpop.f32.mrb[0].mxu0
        %v1209 = vadd.f32 %v1125, %v1208
        %v1210 = vpop.f32.mrb[0].mxu0
        %1211 = vmatprep.mubr.f32.mxu0 0.0
        %1212 = vmatmul.mubr.f32.gmra.mrb[0].mxu0 %v1028
        %v1213 = vpop.f32.mrb[0].mxu0
        %v1214 = vadd.f32 %v1125, %v1213
        %v1215 = vpop.f32.mrb[0].mxu0
        %1216 = vmatprep.mubr.f32.mxu0 0.0
        %1217 = vmatmul.mubr.f32.gmra.mrb[0].mxu0 %v1029
        %v1218 = vpop.f32.mrb[0].mxu0
        %v1219 = vadd.f32 %v1125, %v1218
        %v1220 = vpop.f32.mrb[0].mxu0
        %1221 = vmatprep.mubr.f32.mxu0 0.0
        %1222 = vmatmul.mubr.f32.gmra.mrb[0].mxu0 %v1030
        %v1223 = vpop.f32.mrb[0].mxu0
        %v1224 = vadd.f32 %v1125, %v1223
        %v1225 = vpop.f32.mrb[0].mxu0
        %1226 = vmatprep.mubr.f32.mxu0 0.0
        %1227 = vmatmul.mubr.f32.gmra.mrb[0].mxu0 %v1031
        %v1228 = vpop.f32.mrb[0].mxu0
        %v1229 = vadd.f32 %v1125, %v1228
        %v1230 = vpop.f32.mrb[0].mxu0
        %1231 = vmatprep.mubr.f32.mxu0 0.0
        %1232 = vmatmul.mubr.f32.gmra.mrb[0].mxu0 %v1032
        %v1233 = vpop.f32.mrb[0].mxu0
        %v1234 = vadd.f32 %v1125, %v1233
        %v1235 = vpop.f32.mrb[0].mxu0
        %1236 = vmatprep.mubr.f32.mxu0 0.0
        %1237 = vmatmul.mubr.f32.gmra.mrb[0].mxu0 %v1033
        %v1238 = vpop.f32.mrb[0].mxu0
        %v1239 = vadd.f32 %v1125, %v1238
        %v1240 = vpop.f32.mrb[0].mxu0
        %1241 = vmatprep.mubr.f32.mxu0 0.0
        %1242 = vmatmul.mubr.f32.gmra.mrb[0].mxu0 %v1034
        %v1243 = vpop.f32.mrb[0].mxu0
        %v1244 = vadd.f32 %v1125, %v1243
        %v1245 = vpop.f32.mrb[0].mxu0
        %1246 = vmatprep.mubr.f32.mxu0 0.0
        %1247 = vmatmul.mubr.f32.gmra.mrb[0].mxu0 %v1035
        %v1248 = vpop.f32.mrb[0].mxu0
        %v1249 = vadd.f32 %v1125, %v1248
        %v1250 = vpop.f32.mrb[0].mxu0
        %1251 = vmatprep.mubr.f32.mxu0 0.0
        %1252 = vmatmul.mubr.f32.gmra.mrb[0].mxu0 %v1036
        %v1253 = vpop.f32.mrb[0].mxu0
        %v1254 = vadd.f32 %v1125, %v1253
        %v1255 = vpop.f32.mrb[0].mxu0
        %1256 = vmatprep.mubr.f32.mxu0 0.0
        %1257 = vmatmul.mubr.f32.gmra.mrb[0].mxu0 %v1037
        %v1258 = vpop.f32.mrb[0].mxu0
        %v1259 = vadd.f32 %v1125, %v1258
        %v1260 = vpop.f32.mrb[0].mxu0
        %1261 = vmatprep.mubr.f32.mxu0 0.0
        %1262 = vmatmul.mubr.f32.gmra.mrb[0].mxu0 %v1038
        %v1263 = vpop.f32.mrb[0].mxu0
        %v1264 = vadd.f32 %v1125, %v1263
        %v1265 = vpop.f32.mrb[0].mxu0
        %1266 = vmatprep.mubr.f32.mxu0 0.0
        %1267 = vmatmul.mubr.f32.gmra.mrb[0].mxu0 %v1039
        %v1268 = vpop.f32.mrb[0].mxu0
        %v1269 = vadd.f32 %v1125, %v1268
        %v1270 = vpop.f32.mrb[0].mxu0
        %1271 = vmatprep.mubr.f32.mxu0 0.0
        %1272 = vmatmul.mubr.f32.gmra.mrb[0].mxu0 %v1040
        %v1273 = vpop.f32.mrb[0].mxu0
        %v1274 = vadd.f32 %v1125, %v1273
        %v1275 = vpop.f32.mrb[0].mxu0
        %1276 = vmatprep.mubr.f32.mxu0 0.0
        %1277 = vmatmul.mubr.f32.gmra.mrb[0].mxu0 %v1041
        %v1278 = vpop.f32.mrb[0].mxu0
        %v1279 = vadd.f32 %v1125, %v1278
        %v1280 = vpop.f32.mrb[0].mxu0
        %1281 = vmatprep.mubr.f32.mxu0 0.0
        %1282 = vmatmul.mubr.f32.gmra.mrb[0].mxu0 %v1042
        %v1283 = vpop.f32.mrb[0].mxu0
        %v1284 = vadd.f32 %v1125, %v1283
        %v1285 = vpop.f32.mrb[0].mxu0
        %1286 = vmatprep.mubr.f32.mxu0 0.0
        %1287 = vmatmul.mubr.f32.gmra.mrb[0].mxu0 %v1043
        %v1288 = vpop.f32.mrb[0].mxu0
        %v1289 = vadd.f32 %v1125, %v1288
        %v1290 = vpop.f32.mrb[0].mxu0
        %1291 = vmatprep.mubr.f32.mxu0 0.0
        %1292 = vmatmul.mubr.f32.gmra.mrb[0].mxu0 %v1044
        %v1293 = vpop.f32.mrb[0].mxu0
        %v1294 = vadd.f32 %v1125, %v1293
        %v1295 = vpop.f32.mrb[0].mxu0
        %1296 = vmatprep.mubr.f32.mxu0 0.0
        %1297 = vmatmul.mubr.f32.gmra.mrb[0].mxu0 %v1045
        %v1298 = vpop.f32.mrb[0].mxu0
        %v1299 = vadd.f32 %v1125, %v1298
        %v1300 = vpop.f32.mrb[0].mxu0
        %1301 = vmatprep.mubr.f32.mxu0 0.0
        %1302 = vmatmul.mubr.f32.gmra.mrb[0].mxu0 %v1046
        %v1303 = vpop.f32.mrb[0].mxu0
        %v1304 = vadd.f32 %v1125, %v1303
        %v1305 = vpop.f32.mrb[0].mxu0
        %1306 = vmatprep.mubr.f32.mxu0 0.0
        %1307 = vmatmul.mubr.f32.gmra.mrb[0].mxu0 %v1047
        %v1308 = vpop.f32.mrb[0].mxu0
        %v1309 = vadd.f32 %v1125, %v1308
        %v1310 = vpop.f32.mrb[0].mxu0
        %1311 = vmatprep.mubr.f32.mxu0 0.0
        %1312 = vmatmul.mubr.f32.gmra.mrb[0].mxu0 %v1048
        %v1313 = vpop.f32.mrb[0].mxu0
        %v1314 = vadd.f32 %v1125, %v1313
        %v1315 = vpop.f32.mrb[0].mxu0
        %1316 = vmatprep.mubr.f32.mxu0 0.0
        %1317 = vmatmul.mubr.f32.gmra.mrb[0].mxu0 %v1049
        %v1318 = vpop.f32.mrb[0].mxu0
        %v1319 = vadd.f32 %v1125, %v1318
        %v1320 = vpop.f32.mrb[0].mxu0
        %1321 = vmatprep.mubr.f32.mxu0 0.0
        %1322 = vmatmul.mubr.f32.gmra.mrb[0].mxu0 %v1050
        %v1323 = vpop.f32.mrb[0].mxu0
        %v1324 = vadd.f32 %v1125, %v1323
        %v1325 = vpop.f32.mrb[0].mxu0
        %1326 = vmatprep.mubr.f32.mxu0 0.0
        %1327 = vmatmul.mubr.f32.gmra.mrb[0].mxu0 %v1051
        %v1328 = vpop.f32.mrb[0].mxu0
        %v1329 = vadd.f32 %v1125, %v1328
        %v1330 = vpop.f32.mrb[0].mxu0
        %1331 = vmatprep.mubr.f32.mxu0 0.0
        %1332 = vmatmul.mubr.f32.gmra.mrb[0].mxu0 %v1052
        %v1333 = vpop.f32.mrb[0].mxu0
        %v1334 = vadd.f32 %v1125, %v1333
        %v1335 = vpop.f32.mrb[0].mxu0
        %1336 = vmatprep.mubr.f32.mxu0 0.0
        %1337 = vmatmul.mubr.f32.gmra.mrb[0].mxu0 %v1053
        %v1338 = vpop.f32.mrb[0].mxu0
        %v1339 = vadd.f32 %v1125, %v1338
        %v1340 = vpop.f32.mrb[0].mxu0
        %1341 = vmatprep.mubr.f32.mxu0 0.0
        %1342 = vmatmul.mubr.f32.gmra.mrb[0].mxu0 %v1054
        %v1343 = vpop.f32.mrb[0].mxu0
        %v1344 = vadd.f32 %v1125, %v1343
        %v1345 = vpop.f32.mrb[0].mxu0
        %1346 = vmatprep.mubr.f32.mxu0 0.0
        %1347 = vmatmul.mubr.f32.gmra.mrb[0].mxu0 %v1055
        %v1348 = vpop.f32.mrb[0].mxu0
        %v1349 = vadd.f32 %v1125, %v1348
        %v1350 = vpop.f32.mrb[0].mxu0
        %1351 = vmatprep.mubr.f32.mxu0 0.0
        %1352 = vmatmul.mubr.f32.gmra.mrb[0].mxu0 %v1056
        %v1353 = vpop.f32.mrb[0].mxu0
        %v1354 = vadd.f32 %v1125, %v1353
        %v1355 = vpop.f32.mrb[0].mxu0
        %1356 = vmatprep.mubr.f32.mxu0 0.0
        %1357 = vmatmul.mubr.f32.gmra.mrb[0].mxu0 %v1057
        %v1358 = vpop.f32.mrb[0].mxu0
        %v1359 = vadd.f32 %v1125, %v1358
        %v1360 = vpop.f32.mrb[0].mxu0
        %1361 = vmatprep.mubr.f32.mxu0 0.0
        %1362 = vmatmul.mubr.f32.gmra.mrb[0].mxu0 %v1058
        %v1363 = vpop.f32.mrb[0].mxu0
        %v1364 = vadd.f32 %v1125, %v1363
        %v1365 = vpop.f32.mrb[0].mxu0
        %1366 = vmatprep.mubr.f32.mxu0 0.0
        %1367 = vmatmul.mubr.f32.gmra.mrb[0].mxu0 %v1059
        %v1368 = vpop.f32.mrb[0].mxu0
        %v1369 = vadd.f32 %v1125, %v1368
        %v1370 = vpop.f32.mrb[0].mxu0
        %1371 = vmatprep.mubr.f32.mxu0 0.0
        %1372 = vmatmul.mubr.f32.gmra.mrb[0].mxu0 %v1060
        %v1373 = vpop.f32.mrb[0].mxu0
        %v1374 = vadd.f32 %v1125, %v1373
        %v1375 = vpop.f32.mrb[0].mxu0
        %1376 = vmatprep.mubr.f32.mxu0 0.0
        %1377 = vmatmul.mubr.f32.gmra.mrb[0].mxu0 %v1061
        %v1378 = vpop.f32.mrb[0].mxu0
        %v1379 = vadd.f32 %v1125, %v1378
        %v1380 = vpop.f32.mrb[0].mxu0
        %1381 = vmatprep.mubr.f32.mxu0 0.0
        %1382 = vmatmul.mubr.f32.gmra.mrb[0].mxu0 %v1062
        %v1383 = vpop.f32.mrb[0].mxu0
        %v1384 = vadd.f32 %v1125, %v1383
        %v1385 = vpop.f32.mrb[0].mxu0
        %1386 = vmatprep.mubr.f32.mxu0 0.0
        %1387 = vmatmul.mubr.f32.gmra.mrb[0].mxu0 %v1063
        %v1388 = vpop.f32.mrb[0].mxu0
        %v1389 = vadd.f32 %v1125, %v1388
        %v1390 = vpop.f32.mrb[0].mxu0
        %1391 = vmatprep.mubr.f32.mxu0 0.0
        %1392 = vmatmul.mubr.f32.gmra.mrb[0].mxu0 %v1064
        %v1393 = vpop.f32.mrb[0].mxu0
        %v1394 = vadd.f32 %v1125, %v1393
        %v1395 = vpop.f32.mrb[0].mxu0
        %1396 = vmatprep.mubr.f32.mxu0 0.0
        %1397 = vmatmul.mubr.f32.gmra.mrb[0].mxu0 %v1065
        %v1398 = vpop.f32.mrb[0].mxu0
        %v1399 = vadd.f32 %v1125, %v1398
        %v1400 = vpop.f32.mrb[0].mxu0
        %1401 = vmatprep.mubr.f32.mxu0 0.0
        %1402 = vmatmul.mubr.f32.gmra.mrb[0].mxu0 %v1066
        %v1403 = vpop.f32.mrb[0].mxu0
        %v1404 = vadd.f32 %v1125, %v1403
        %v1405 = vpop.f32.mrb[0].mxu0
        %1406 = vmatprep.mubr.f32.mxu0 0.0
        %1407 = vmatmul.mubr.f32.gmra.mrb[0].mxu0 %v1067
        %v1408 = vpop.f32.mrb[0].mxu0
        %v1409 = vadd.f32 %v1125, %v1408
        %v1410 = vpop.f32.mrb[0].mxu0
        %1411 = vmatprep.mubr.f32.mxu0 0.0
        %1412 = vmatmul.mubr.f32.gmra.mrb[0].mxu0 %v1068
        %v1413 = vpop.f32.mrb[0].mxu0
        %v1414 = vadd.f32 %v1125, %v1413
        %v1415 = vpop.f32.mrb[0].mxu0
        %1416 = vmatprep.mubr.f32.mxu0 0.0
        %1417 = vmatmul.mubr.f32.gmra.mrb[0].mxu0 %v1069
        %v1418 = vpop.f32.mrb[0].mxu0
        %v1419 = vadd.f32 %v1125, %v1418
        %v1420 = vpop.f32.mrb[0].mxu0
        %1421 = vmatprep.mubr.f32.mxu0 0.0
        %1422 = vmatmul.mubr.f32.gmra.mrb[0].mxu0 %v1070
        %v1423 = vpop.f32.mrb[0].mxu0
        %v1424 = vadd.f32 %v1125, %v1423
        %v1425 = vpop.f32.mrb[0].mxu0
        %1426 = vmatprep.mubr.f32.mxu0 0.0
        %1427 = vmatmul.mubr.f32.gmra.mrb[0].mxu0 %v1071
        %v1428 = vpop.f32.mrb[0].mxu0
        %v1429 = vadd.f32 %v1125, %v1428
        %v1430 = vpop.f32.mrb[0].mxu0
        %1431 = vmatprep.mubr.f32.mxu0 0.0
        %1432 = vmatmul.mubr.f32.gmra.mrb[0].mxu0 %v1072
        %v1433 = vpop.f32.mrb[0].mxu0
        %v1434 = vadd.f32 %v1125, %v1433
        %v1435 = vpop.f32.mrb[0].mxu0
        %1436 = vmatprep.mubr.f32.mxu0 0.0
        %1437 = vmatmul.mubr.f32.gmra.mrb[0].mxu0 %v1073
        %v1438 = vpop.f32.mrb[0].mxu0
        %v1439 = vadd.f32 %v1125, %v1438
        %v1440 = vpop.f32.mrb[0].mxu0
        %1441 = vmatprep.mubr.f32.mxu0 0.0
        %1442 = vmatmul.mubr.f32.gmra.mrb[0].mxu0 %v1074
        %v1443 = vpop.f32.mrb[0].mxu0
        %v1444 = vadd.f32 %v1125, %v1443
        %v1445 = vpop.f32.mrb[0].mxu0
        %1446 = vmatprep.mubr.f32.mxu0 0.0
        %1447 = vmatmul.mubr.f32.gmra.mrb[0].mxu0 %v1075
        %v1448 = vpop.f32.mrb[0].mxu0
        %v1449 = vadd.f32 %v1125, %v1448
        %v1450 = vpop.f32.mrb[0].mxu0
        %1451 = vmatprep.mubr.f32.mxu0 0.0
        %1452 = vmatmul.mubr.f32.gmra.mrb[0].mxu0 %v1076
        %v1453 = vpop.f32.mrb[0].mxu0
        %v1454 = vadd.f32 %v1125, %v1453
        %v1455 = vpop.f32.mrb[0].mxu0
        %1456 = vmatprep.mubr.f32.mxu0 0.0
        %1457 = vmatmul.mubr.f32.gmra.mrb[0].mxu0 %v1077
        %v1458 = vpop.f32.mrb[0].mxu0
        %v1459 = vadd.f32 %v1125, %v1458
        %v1460 = vpop.f32.mrb[0].mxu0
        %1461 = vmatprep.mubr.f32.mxu0 0.0
        %1462 = vmatmul.mubr.f32.gmra.mrb[0].mxu0 %v1078
        %v1463 = vpop.f32.mrb[0].mxu0
        %v1464 = vadd.f32 %v1125, %v1463
        %v1465 = vpop.f32.mrb[0].mxu0
        %1466 = vmatprep.mubr.f32.mxu0 0.0
        %1467 = vmatmul.mubr.f32.gmra.mrb[0].mxu0 %v1079
        %v1468 = vpop.f32.mrb[0].mxu0
        %v1469 = vadd.f32 %v1125, %v1468
        %v1470 = vpop.f32.mrb[0].mxu0
        %1471 = vmatprep.mubr.f32.mxu0 0.0
        %1472 = vmatmul.mubr.f32.gmra.mrb[0].mxu0 %v1080
        %v1473 = vpop.f32.mrb[0].mxu0
        %v1474 = vadd.f32 %v1125, %v1473
        %v1475 = vpop.f32.mrb[0].mxu0
        %1476 = vmatprep.mubr.f32.mxu0 0.0
        %1477 = vmatmul.mubr.f32.gmra.mrb[0].mxu0 %v1081
        %v1478 = vpop.f32.mrb[0].mxu0
        %v1479 = vadd.f32 %v1125, %v1478
        %v1480 = vpop.f32.mrb[0].mxu0
        %1481 = vmatprep.mubr.f32.mxu0 0.0
        %1482 = vmatmul.mubr.f32.gmra.mrb[0].mxu0 %v1082
        %v1483 = vpop.f32.mrb[0].mxu0
        %v1484 = vadd.f32 %v1125, %v1483
        %v1485 = vpop.f32.mrb[0].mxu0
        %1486 = vmatprep.mubr.f32.mxu0 0.0
        %1487 = vmatmul.mubr.f32.gmra.mrb[0].mxu0 %v1083
        %v1488 = vpop.f32.mrb[0].mxu0
        %v1489 = vadd.f32 %v1125, %v1488
        %v1490 = vpop.f32.mrb[0].mxu0
        %1491 = vmatprep.mubr.f32.mxu0 0.0
        %1492 = vmatmul.mubr.f32.gmra.mrb[0].mxu0 %v1084
        %v1493 = vpop.f32.mrb[0].mxu0
        %v1494 = vadd.f32 %v1125, %v1493
        %v1495 = vpop.f32.mrb[0].mxu0
        %1496 = vmatprep.mubr.f32.mxu0 0.0
        %1497 = vmatmul.mubr.f32.gmra.mrb[0].mxu0 %v1085
        %v1498 = vpop.f32.mrb[0].mxu0
        %v1499 = vadd.f32 %v1125, %v1498
        %v1500 = vpop.f32.mrb[0].mxu0
        %1501 = vmatprep.mubr.f32.mxu0 0.0
        %1502 = vmatmul.mubr.f32.gmra.mrb[0].mxu0 %v1086
        %v1503 = vpop.f32.mrb[0].mxu0
        %v1504 = vadd.f32 %v1125, %v1503
        %v1505 = vpop.f32.mrb[0].mxu0
        %1506 = vmatprep.mubr.f32.mxu0 0.0
        %1507 = vmatmul.mubr.f32.gmra.mrb[0].mxu0 %v1087
        %v1508 = vpop.f32.mrb[0].mxu0
        %v1509 = vadd.f32 %v1125, %v1508
        %v1510 = vpop.f32.mrb[0].mxu0
        %1511 = vmatprep.mubr.f32.mxu0 0.0
        %1512 = vmatmul.mubr.f32.gmra.mrb[0].mxu0 %v1088
        %v1513 = vpop.f32.mrb[0].mxu0
        %v1514 = vadd.f32 %v1125, %v1513
        %v1515 = vpop.f32.mrb[0].mxu0
        %1516 = vmatprep.mubr.f32.mxu0 0.0
        %1517 = vmatmul.mubr.f32.gmra.mrb[0].mxu0 %v1089
        %v1518 = vpop.f32.mrb[0].mxu0
        %v1519 = vadd.f32 %v1125, %v1518
        %v1520 = vpop.f32.mrb[0].mxu0
        %1521 = vmatprep.mubr.f32.mxu0 0.0
        %1522 = vmatmul.mubr.f32.gmra.mrb[0].mxu0 %v1090
        %v1523 = vpop.f32.mrb[0].mxu0
        %v1524 = vadd.f32 %v1125, %v1523
        %v1525 = vpop.f32.mrb[0].mxu0
        %1526 = vmatprep.mubr.f32.mxu0 0.0
        %1527 = vmatmul.mubr.f32.gmra.mrb[0].mxu0 %v1091
        %v1528 = vpop.f32.mrb[0].mxu0
        %v1529 = vadd.f32 %v1125, %v1528
        %v1530 = vpop.f32.mrb[0].mxu0
        %1531 = vmatprep.mubr.f32.mxu0 0.0
        %1532 = vmatmul.mubr.f32.gmra.mrb[0].mxu0 %v1092
        %v1533 = vpop.f32.mrb[0].mxu0
        %v1534 = vadd.f32 %v1125, %v1533
        %v1535 = vpop.f32.mrb[0].mxu0
        %1536 = vmatprep.mubr.f32.mxu0 0.0
        %1537 = vmatmul.mubr.f32.gmra.mrb[0].mxu0 %v1093
        %v1538 = vpop.f32.mrb[0].mxu0
        %v1539 = vadd.f32 %v1125, %v1538
        %v1540 = vpop.f32.mrb[0].mxu0
        %1541 = vmatprep.mubr.f32.mxu0 0.0
        %1542 = vmatmul.mubr.f32.gmra.mrb[0].mxu0 %v1094
        %v1543 = vpop.f32.mrb[0].mxu0
        %v1544 = vadd.f32 %v1125, %v1543
        %v1545 = vpop.f32.mrb[0].mxu0
        %1546 = vmatprep.mubr.f32.mxu0 0.0
        %1547 = vmatmul.mubr.f32.gmra.mrb[0].mxu0 %v1095
        %v1548 = vpop.f32.mrb[0].mxu0
        %v1549 = vadd.f32 %v1125, %v1548
        %v1550 = vpop.f32.mrb[0].mxu0
        %1551 = vmatprep.mubr.f32.mxu0 0.0
        %1552 = vmatmul.mubr.f32.gmra.mrb[0].mxu0 %v1096
        %v1553 = vpop.f32.mrb[0].mxu0
        %v1554 = vadd.f32 %v1125, %v1553
        %v1555 = vpop.f32.mrb[0].mxu0
        %1556 = vmatprep.mubr.f32.mxu0 0.0
        %1557 = vmatmul.mubr.f32.gmra.mrb[0].mxu0 %v1097
        %v1558 = vpop.f32.mrb[0].mxu0
        %v1559 = vadd.f32 %v1125, %v1558
        %v1560 = vpop.f32.mrb[0].mxu0
        %1561 = vmatprep.mubr.f32.mxu0 0.0
        %1562 = vmatmul.mubr.f32.gmra.mrb[0].mxu0 %v1098
        %v1563 = vpop.f32.mrb[0].mxu0
        %v1564 = vadd.f32 %v1125, %v1563
        %v1565 = vpop.f32.mrb[0].mxu0
        %1566 = vmatprep.mubr.f32.mxu0 0.0
        %1567 = vmatmul.mubr.f32.gmra.mrb[0].mxu0 %v1099
        %v1568 = vpop.f32.mrb[0].mxu0
        %v1569 = vadd.f32 %v1125, %v1568
        %v1570 = vpop.f32.mrb[0].mxu0
        %1571 = vmatprep.mubr.f32.mxu0 0.0
        %1572 = vmatmul.mubr.f32.gmra.mrb[0].mxu0 %v1100
        %v1573 = vpop.f32.mrb[0].mxu0
        %v1574 = vadd.f32 %v1125, %v1573
        %v1575 = vpop.f32.mrb[0].mxu0
        %1576 = vmatprep.mubr.f32.mxu0 0.0
        %1577 = vmatmul.mubr.f32.gmra.mrb[0].mxu0 %v1101
        %v1578 = vpop.f32.mrb[0].mxu0
        %v1579 = vadd.f32 %v1125, %v1578
        %v1580 = vpop.f32.mrb[0].mxu0
        %1581 = vmatprep.mubr.f32.mxu0 0.0
        %1582 = vmatmul.mubr.f32.gmra.mrb[0].mxu0 %v1102
        %v1583 = vpop.f32.mrb[0].mxu0
        %v1584 = vadd.f32 %v1125, %v1583
        %v1585 = vpop.f32.mrb[0].mxu0
        %1586 = vmatprep.mubr.f32.mxu0 0.0
        %1587 = vmatmul.mubr.f32.gmra.mrb[0].mxu0 %v1103
        %v1588 = vpop.f32.mrb[0].mxu0
        %v1589 = vadd.f32 %v1125, %v1588
        %v1590 = vpop.f32.mrb[0].mxu0
        %1591 = vdwg.mxu0
        %v1592 = vmax.f32 %v1194, 0.0
        %v1593 = vmax.f32 %v1199, 0.0
        %v1594 = vmax.f32 %v1204, 0.0
        %v1595 = vmax.f32 %v1209, 0.0
        %v1596 = vmax.f32 %v1214, 0.0
        %v1597 = vmax.f32 %v1219, 0.0
        %v1598 = vmax.f32 %v1224, 0.0
        %v1599 = vmax.f32 %v1229, 0.0
        %v1600 = vmax.f32 %v1234, 0.0
        %v1601 = vmax.f32 %v1239, 0.0
        %v1602 = vmax.f32 %v1244, 0.0
        %v1603 = vmax.f32 %v1249, 0.0
        %v1604 = vmax.f32 %v1254, 0.0
        %v1605 = vmax.f32 %v1259, 0.0
        %v1606 = vmax.f32 %v1264, 0.0
        %v1607 = vmax.f32 %v1269, 0.0
        %v1608 = vmax.f32 %v1274, 0.0
        %v1609 = vmax.f32 %v1279, 0.0
        %v1610 = vmax.f32 %v1284, 0.0
        %v1611 = vmax.f32 %v1289, 0.0
        %v1612 = vmax.f32 %v1294, 0.0
        %v1613 = vmax.f32 %v1299, 0.0
        %v1614 = vmax.f32 %v1304, 0.0
        %v1615 = vmax.f32 %v1309, 0.0
        %v1616 = vmax.f32 %v1314, 0.0
        %v1617 = vmax.f32 %v1319, 0.0
        %v1618 = vmax.f32 %v1324, 0.0
        %v1619 = vmax.f32 %v1329, 0.0
        %v1620 = vmax.f32 %v1334, 0.0
        %v1621 = vmax.f32 %v1339, 0.0
        %v1622 = vmax.f32 %v1344, 0.0
        %v1623 = vmax.f32 %v1349, 0.0
        %v1624 = vmax.f32 %v1354, 0.0
        %v1625 = vmax.f32 %v1359, 0.0
        %v1626 = vmax.f32 %v1364, 0.0
        %v1627 = vmax.f32 %v1369, 0.0
        %v1628 = vmax.f32 %v1374, 0.0
        %v1629 = vmax.f32 %v1379, 0.0
        %v1630 = vmax.f32 %v1384, 0.0
        %v1631 = vmax.f32 %v1389, 0.0
        %v1632 = vmax.f32 %v1394, 0.0
        %v1633 = vmax.f32 %v1399, 0.0
        %v1634 = vmax.f32 %v1404, 0.0
        %v1635 = vmax.f32 %v1409, 0.0
        %v1636 = vmax.f32 %v1414, 0.0
        %v1637 = vmax.f32 %v1419, 0.0
        %v1638 = vmax.f32 %v1424, 0.0
        %v1639 = vmax.f32 %v1429, 0.0
        %v1640 = vmax.f32 %v1434, 0.0
        %v1641 = vmax.f32 %v1439, 0.0
        %v1642 = vmax.f32 %v1444, 0.0
        %v1643 = vmax.f32 %v1449, 0.0
        %v1644 = vmax.f32 %v1454, 0.0
        %v1645 = vmax.f32 %v1459, 0.0
        %v1646 = vmax.f32 %v1464, 0.0
        %v1647 = vmax.f32 %v1469, 0.0
        %v1648 = vmax.f32 %v1474, 0.0
        %v1649 = vmax.f32 %v1479, 0.0
        %v1650 = vmax.f32 %v1484, 0.0
        %v1651 = vmax.f32 %v1489, 0.0
        %v1652 = vmax.f32 %v1494, 0.0
        %v1653 = vmax.f32 %v1499, 0.0
        %v1654 = vmax.f32 %v1504, 0.0
        %v1655 = vmax.f32 %v1509, 0.0
        %v1656 = vmax.f32 %v1514, 0.0
        %v1657 = vmax.f32 %v1519, 0.0
        %v1658 = vmax.f32 %v1524, 0.0
        %v1659 = vmax.f32 %v1529, 0.0
        %v1660 = vmax.f32 %v1534, 0.0
        %v1661 = vmax.f32 %v1539, 0.0
        %v1662 = vmax.f32 %v1544, 0.0
        %v1663 = vmax.f32 %v1549, 0.0
        %v1664 = vmax.f32 %v1554, 0.0
        %v1665 = vmax.f32 %v1559, 0.0
        %v1666 = vmax.f32 %v1564, 0.0
        %v1667 = vmax.f32 %v1569, 0.0
        %v1668 = vmax.f32 %v1574, 0.0
        %v1669 = vmax.f32 %v1579, 0.0
        %v1670 = vmax.f32 %v1584, 0.0
        %v1671 = vmax.f32 %v1589, 0.0
        %v1672 = vmax.f32 %v1592, %v1593
        %v1673 = vrot.slane %v1672, 4
        %v1674 = vmax.f32 %v1672, %v1673
        %v1675 = vrot.slane %v1674, 2
        %v1676 = vmax.f32 %v1674, %v1675
        %v1677 = vrot.slane %v1676, 1
        %v1678 = vmax.f32 %v1676, %v1677
        %v1679 = vmax.f32 %v1594, %v1595
        %v1680 = vrot.slane %v1679, 4
        %v1681 = vmax.f32 %v1679, %v1680
        %v1682 = vrot.slane %v1681, 2
        %v1683 = vmax.f32 %v1681, %v1682
        %v1684 = vrot.slane %v1683, 1
        %v1685 = vmax.f32 %v1683, %v1684
        %v1686 = vmax.f32 %v1596, %v1597
        %v1687 = vrot.slane %v1686, 4
        %v1688 = vmax.f32 %v1686, %v1687
        %v1689 = vrot.slane %v1688, 2
        %v1690 = vmax.f32 %v1688, %v1689
        %v1691 = vrot.slane %v1690, 1
        %v1692 = vmax.f32 %v1690, %v1691
        %v1693 = vmax.f32 %v1598, %v1599
        %v1694 = vrot.slane %v1693, 4
        %v1695 = vmax.f32 %v1693, %v1694
        %v1696 = vrot.slane %v1695, 2
        %v1697 = vmax.f32 %v1695, %v1696
        %v1698 = vrot.slane %v1697, 1
        %v1699 = vmax.f32 %v1697, %v1698
        %v1700 = vmax.f32 %v1600, %v1601
        %v1701 = vrot.slane %v1700, 4
        %v1702 = vmax.f32 %v1700, %v1701
        %v1703 = vrot.slane %v1702, 2
        %v1704 = vmax.f32 %v1702, %v1703
        %v1705 = vrot.slane %v1704, 1
        %v1706 = vmax.f32 %v1704, %v1705
        %v1707 = vmax.f32 %v1602, %v1603
        %v1708 = vrot.slane %v1707, 4
        %v1709 = vmax.f32 %v1707, %v1708
        %v1710 = vrot.slane %v1709, 2
        %v1711 = vmax.f32 %v1709, %v1710
        %v1712 = vrot.slane %v1711, 1
        %v1713 = vmax.f32 %v1711, %v1712
        %v1714 = vmax.f32 %v1604, %v1605
        %v1715 = vrot.slane %v1714, 4
        %v1716 = vmax.f32 %v1714, %v1715
        %v1717 = vrot.slane %v1716, 2
        %v1718 = vmax.f32 %v1716, %v1717
        %v1719 = vrot.slane %v1718, 1
        %v1720 = vmax.f32 %v1718, %v1719
        %v1721 = vmax.f32 %v1606, %v1607
        %v1722 = vrot.slane %v1721, 4
        %v1723 = vmax.f32 %v1721, %v1722
        %v1724 = vrot.slane %v1723, 2
        %v1725 = vmax.f32 %v1723, %v1724
        %v1726 = vrot.slane %v1725, 1
        %v1727 = vmax.f32 %v1725, %v1726
        %v1728 = vmax.f32 %v1608, %v1609
        %v1729 = vrot.slane %v1728, 4
        %v1730 = vmax.f32 %v1728, %v1729
        %v1731 = vrot.slane %v1730, 2
        %v1732 = vmax.f32 %v1730, %v1731
        %v1733 = vrot.slane %v1732, 1
        %v1734 = vmax.f32 %v1732, %v1733
        %v1735 = vmax.f32 %v1610, %v1611
        %v1736 = vrot.slane %v1735, 4
        %v1737 = vmax.f32 %v1735, %v1736
        %v1738 = vrot.slane %v1737, 2
        %v1739 = vmax.f32 %v1737, %v1738
        %v1740 = vrot.slane %v1739, 1
        %v1741 = vmax.f32 %v1739, %v1740
        %v1742 = vmax.f32 %v1612, %v1613
        %v1743 = vrot.slane %v1742, 4
        %v1744 = vmax.f32 %v1742, %v1743
        %v1745 = vrot.slane %v1744, 2
        %v1746 = vmax.f32 %v1744, %v1745
        %v1747 = vrot.slane %v1746, 1
        %v1748 = vmax.f32 %v1746, %v1747
        %v1749 = vmax.f32 %v1614, %v1615
        %v1750 = vrot.slane %v1749, 4
        %v1751 = vmax.f32 %v1749, %v1750
        %v1752 = vrot.slane %v1751, 2
        %v1753 = vmax.f32 %v1751, %v1752
        %v1754 = vrot.slane %v1753, 1
        %v1755 = vmax.f32 %v1753, %v1754
        %v1756 = vmax.f32 %v1616, %v1617
        %v1757 = vrot.slane %v1756, 4
        %v1758 = vmax.f32 %v1756, %v1757
        %v1759 = vrot.slane %v1758, 2
        %v1760 = vmax.f32 %v1758, %v1759
        %v1761 = vrot.slane %v1760, 1
        %v1762 = vmax.f32 %v1760, %v1761
        %v1763 = vmax.f32 %v1618, %v1619
        %v1764 = vrot.slane %v1763, 4
        %v1765 = vmax.f32 %v1763, %v1764
        %v1766 = vrot.slane %v1765, 2
        %v1767 = vmax.f32 %v1765, %v1766
        %v1768 = vrot.slane %v1767, 1
        %v1769 = vmax.f32 %v1767, %v1768
        %v1770 = vmax.f32 %v1620, %v1621
        %v1771 = vrot.slane %v1770, 4
        %v1772 = vmax.f32 %v1770, %v1771
        %v1773 = vrot.slane %v1772, 2
        %v1774 = vmax.f32 %v1772, %v1773
        %v1775 = vrot.slane %v1774, 1
        %v1776 = vmax.f32 %v1774, %v1775
        %v1777 = vmax.f32 %v1622, %v1623
        %v1778 = vrot.slane %v1777, 4
        %v1779 = vmax.f32 %v1777, %v1778
        %v1780 = vrot.slane %v1779, 2
        %v1781 = vmax.f32 %v1779, %v1780
        %v1782 = vrot.slane %v1781, 1
        %v1783 = vmax.f32 %v1781, %v1782
        %v1784 = vmax.f32 %v1624, %v1625
        %v1785 = vrot.slane %v1784, 4
        %v1786 = vmax.f32 %v1784, %v1785
        %v1787 = vrot.slane %v1786, 2
        %v1788 = vmax.f32 %v1786, %v1787
        %v1789 = vrot.slane %v1788, 1
        %v1790 = vmax.f32 %v1788, %v1789
        %v1791 = vmax.f32 %v1626, %v1627
        %v1792 = vrot.slane %v1791, 4
        %v1793 = vmax.f32 %v1791, %v1792
        %v1794 = vrot.slane %v1793, 2
        %v1795 = vmax.f32 %v1793, %v1794
        %v1796 = vrot.slane %v1795, 1
        %v1797 = vmax.f32 %v1795, %v1796
        %v1798 = vmax.f32 %v1628, %v1629
        %v1799 = vrot.slane %v1798, 4
        %v1800 = vmax.f32 %v1798, %v1799
        %v1801 = vrot.slane %v1800, 2
        %v1802 = vmax.f32 %v1800, %v1801
        %v1803 = vrot.slane %v1802, 1
        %v1804 = vmax.f32 %v1802, %v1803
        %v1805 = vmax.f32 %v1630, %v1631
        %v1806 = vrot.slane %v1805, 4
        %v1807 = vmax.f32 %v1805, %v1806
        %v1808 = vrot.slane %v1807, 2
        %v1809 = vmax.f32 %v1807, %v1808
        %v1810 = vrot.slane %v1809, 1
        %v1811 = vmax.f32 %v1809, %v1810
        %v1812 = vmax.f32 %v1632, %v1633
        %v1813 = vrot.slane %v1812, 4
        %v1814 = vmax.f32 %v1812, %v1813
        %v1815 = vrot.slane %v1814, 2
        %v1816 = vmax.f32 %v1814, %v1815
        %v1817 = vrot.slane %v1816, 1
        %v1818 = vmax.f32 %v1816, %v1817
        %v1819 = vmax.f32 %v1634, %v1635
        %v1820 = vrot.slane %v1819, 4
        %v1821 = vmax.f32 %v1819, %v1820
        %v1822 = vrot.slane %v1821, 2
        %v1823 = vmax.f32 %v1821, %v1822
        %v1824 = vrot.slane %v1823, 1
        %v1825 = vmax.f32 %v1823, %v1824
        %v1826 = vmax.f32 %v1636, %v1637
        %v1827 = vrot.slane %v1826, 4
        %v1828 = vmax.f32 %v1826, %v1827
        %v1829 = vrot.slane %v1828, 2
        %v1830 = vmax.f32 %v1828, %v1829
        %v1831 = vrot.slane %v1830, 1
        %v1832 = vmax.f32 %v1830, %v1831
        %v1833 = vmax.f32 %v1638, %v1639
        %v1834 = vrot.slane %v1833, 4
        %v1835 = vmax.f32 %v1833, %v1834
        %v1836 = vrot.slane %v1835, 2
        %v1837 = vmax.f32 %v1835, %v1836
        %v1838 = vrot.slane %v1837, 1
        %v1839 = vmax.f32 %v1837, %v1838
        %v1840 = vmax.f32 %v1640, %v1641
        %v1841 = vrot.slane %v1840, 4
        %v1842 = vmax.f32 %v1840, %v1841
        %v1843 = vrot.slane %v1842, 2
        %v1844 = vmax.f32 %v1842, %v1843
        %v1845 = vrot.slane %v1844, 1
        %v1846 = vmax.f32 %v1844, %v1845
        %v1847 = vmax.f32 %v1642, %v1643
        %v1848 = vrot.slane %v1847, 4
        %v1849 = vmax.f32 %v1847, %v1848
        %v1850 = vrot.slane %v1849, 2
        %v1851 = vmax.f32 %v1849, %v1850
        %v1852 = vrot.slane %v1851, 1
        %v1853 = vmax.f32 %v1851, %v1852
        %v1854 = vmax.f32 %v1644, %v1645
        %v1855 = vrot.slane %v1854, 4
        %v1856 = vmax.f32 %v1854, %v1855
        %v1857 = vrot.slane %v1856, 2
        %v1858 = vmax.f32 %v1856, %v1857
        %v1859 = vrot.slane %v1858, 1
        %v1860 = vmax.f32 %v1858, %v1859
        %v1861 = vmax.f32 %v1646, %v1647
        %v1862 = vrot.slane %v1861, 4
        %v1863 = vmax.f32 %v1861, %v1862
        %v1864 = vrot.slane %v1863, 2
        %v1865 = vmax.f32 %v1863, %v1864
        %v1866 = vrot.slane %v1865, 1
        %v1867 = vmax.f32 %v1865, %v1866
        %v1868 = vmax.f32 %v1648, %v1649
        %v1869 = vrot.slane %v1868, 4
        %v1870 = vmax.f32 %v1868, %v1869
        %v1871 = vrot.slane %v1870, 2
        %v1872 = vmax.f32 %v1870, %v1871
        %v1873 = vrot.slane %v1872, 1
        %v1874 = vmax.f32 %v1872, %v1873
        %v1875 = vmax.f32 %v1650, %v1651
        %v1876 = vrot.slane %v1875, 4
        %v1877 = vmax.f32 %v1875, %v1876
        %v1878 = vrot.slane %v1877, 2
        %v1879 = vmax.f32 %v1877, %v1878
        %v1880 = vrot.slane %v1879, 1
        %v1881 = vmax.f32 %v1879, %v1880
        %v1882 = vmax.f32 %v1652, %v1653
        %v1883 = vrot.slane %v1882, 4
        %v1884 = vmax.f32 %v1882, %v1883
        %v1885 = vrot.slane %v1884, 2
        %v1886 = vmax.f32 %v1884, %v1885
        %v1887 = vrot.slane %v1886, 1
        %v1888 = vmax.f32 %v1886, %v1887
        %v1889 = vmax.f32 %v1654, %v1655
        %v1890 = vrot.slane %v1889, 4
        %v1891 = vmax.f32 %v1889, %v1890
        %v1892 = vrot.slane %v1891, 2
        %v1893 = vmax.f32 %v1891, %v1892
        %v1894 = vrot.slane %v1893, 1
        %v1895 = vmax.f32 %v1893, %v1894
        %v1896 = vmax.f32 %v1656, %v1657
        %v1897 = vrot.slane %v1896, 4
        %v1898 = vmax.f32 %v1896, %v1897
        %v1899 = vrot.slane %v1898, 2
        %v1900 = vmax.f32 %v1898, %v1899
        %v1901 = vrot.slane %v1900, 1
        %v1902 = vmax.f32 %v1900, %v1901
        %v1903 = vmax.f32 %v1658, %v1659
        %v1904 = vrot.slane %v1903, 4
        %v1905 = vmax.f32 %v1903, %v1904
        %v1906 = vrot.slane %v1905, 2
        %v1907 = vmax.f32 %v1905, %v1906
        %v1908 = vrot.slane %v1907, 1
        %v1909 = vmax.f32 %v1907, %v1908
        %v1910 = vmax.f32 %v1660, %v1661
        %v1911 = vrot.slane %v1910, 4
        %v1912 = vmax.f32 %v1910, %v1911
        %v1913 = vrot.slane %v1912, 2
        %v1914 = vmax.f32 %v1912, %v1913
        %v1915 = vrot.slane %v1914, 1
        %v1916 = vmax.f32 %v1914, %v1915
        %v1917 = vmax.f32 %v1662, %v1663
        %v1918 = vrot.slane %v1917, 4
        %v1919 = vmax.f32 %v1917, %v1918
        %v1920 = vrot.slane %v1919, 2
        %v1921 = vmax.f32 %v1919, %v1920
        %v1922 = vrot.slane %v1921, 1
        %v1923 = vmax.f32 %v1921, %v1922
        %v1924 = vmax.f32 %v1664, %v1665
        %v1925 = vrot.slane %v1924, 4
        %v1926 = vmax.f32 %v1924, %v1925
        %v1927 = vrot.slane %v1926, 2
        %v1928 = vmax.f32 %v1926, %v1927
        %v1929 = vrot.slane %v1928, 1
        %v1930 = vmax.f32 %v1928, %v1929
        %v1931 = vmax.f32 %v1666, %v1667
        %v1932 = vrot.slane %v1931, 4
        %v1933 = vmax.f32 %v1931, %v1932
        %v1934 = vrot.slane %v1933, 2
        %v1935 = vmax.f32 %v1933, %v1934
        %v1936 = vrot.slane %v1935, 1
        %v1937 = vmax.f32 %v1935, %v1936
        %v1938 = vmax.f32 %v1668, %v1669
        %v1939 = vrot.slane %v1938, 4
        %v1940 = vmax.f32 %v1938, %v1939
        %v1941 = vrot.slane %v1940, 2
        %v1942 = vmax.f32 %v1940, %v1941
        %v1943 = vrot.slane %v1942, 1
        %v1944 = vmax.f32 %v1942, %v1943
        %v1945 = vmax.f32 %v1670, %v1671
        %v1946 = vrot.slane %v1945, 4
        %v1947 = vmax.f32 %v1945, %v1946
        %v1948 = vrot.slane %v1947, 2
        %v1949 = vmax.f32 %v1947, %v1948
        %v1950 = vrot.slane %v1949, 1
        %v1951 = vmax.f32 %v1949, %v1950
        %vm1992 = vcmask 1041409
        %v1993 = vsel %vm1992, %v1685, %v1678
        %vm1994 = vcmask 1042434
        %v1995 = vsel %vm1994, %v1692, %v1993
        %vm1996 = vcmask 1043459
        %v1997 = vsel %vm1996, %v1699, %v1995
        %vm1998 = vcmask 1044484
        %v1999 = vsel %vm1998, %v1706, %v1997
        %vm2000 = vcmask 1045509
        %v2001 = vsel %vm2000, %v1713, %v1999
        %vm2002 = vcmask 1046534
        %v2003 = vsel %vm2002, %v1720, %v2001
        %vm2004 = vcmask 1047559
        %v2005 = vsel %vm2004, %v1727, %v2003
        %v2006 = vsel %vm1992, %v1741, %v1734
        %v2007 = vsel %vm1994, %v1748, %v2006
        %v2008 = vsel %vm1996, %v1755, %v2007
        %v2009 = vsel %vm1998, %v1762, %v2008
        %v2010 = vsel %vm2000, %v1769, %v2009
        %v2011 = vsel %vm2002, %v1776, %v2010
        %v2012 = vsel %vm2004, %v1783, %v2011
        %v2013 = vsel %vm1992, %v1797, %v1790
        %v2014 = vsel %vm1994, %v1804, %v2013
        %v2015 = vsel %vm1996, %v1811, %v2014
        %v2016 = vsel %vm1998, %v1818, %v2015
        %v2017 = vsel %vm2000, %v1825, %v2016
        %v2018 = vsel %vm2002, %v1832, %v2017
        %v2019 = vsel %vm2004, %v1839, %v2018
        %v2020 = vsel %vm1992, %v1853, %v1846
        %v2021 = vsel %vm1994, %v1860, %v2020
        %v2022 = vsel %vm1996, %v1867, %v2021
        %v2023 = vsel %vm1998, %v1874, %v2022
        %v2024 = vsel %vm2000, %v1881, %v2023
        %v2025 = vsel %vm2002, %v1888, %v2024
        %v2026 = vsel %vm2004, %v1895, %v2025
        %v2027 = vsel %vm1992, %v1909, %v1902
        %v2028 = vsel %vm1994, %v1916, %v2027
        %v2029 = vsel %vm1996, %v1923, %v2028
        %v2030 = vsel %vm1998, %v1930, %v2029
        %v2031 = vsel %vm2000, %v1937, %v2030
        %v2032 = vsel %vm2002, %v1944, %v2031
        %v2033 = vsel %vm2004, %v1951, %v2032
        %2039 = vst [vmem:[%s218] sm:$0xff] %v2005
        %2040 = vst [vmem:[%s218 + $0x8] sm:$0xff] %v2012
        %2041 = vst [vmem:[%s218 + $0x10] sm:$0xff] %v2019
        %2042 = vst [vmem:[%s218 + $0x18] sm:$0xff] %v2026
        %2043 = vst [vmem:[%s218 + $0x20] sm:$0xff] %v2033
        %s2044 = sand.u32 %s137, 1
        %s2045 = scalar_lea.sflag [#allocation3], %s2044
        %s2046 = sand.u32 %s137, 1
        %s2047 = smul.addr %s2046, 40
        %s2048 = scalar_lea.vmem [#allocation2], %s2047
        // Predicated region
        $region41: #{tpu_custom_call.1} parent=39 // pred_check
          %p2049 = pneg %p147
        $region42: #{tpu_custom_call.1} parent=39 // pred_check_branch
          %2051 = sbr.rel (%p2049) target = $region44
        $region43: #{tpu_custom_call.1} parent=39 // pred_region
          %s2052 = smul.u32 5, %s19
          %s2054 = ssub.s32 640, 640
          %2055 = vsyncadd %s2045, %s2054
          %s2056 = smul.addr %s2052, 128
          %s2057 = scalar_lea.hbm %s5, %s2056
          %s2058 = sshll.u32 %s2048, 4
          %s2059 = int_to_ptr.vmem [resolvable:$true] %s2058
          %2064 = dma.vmem_to_hbm [thread:$0]  %s2059, 640, %s2057, %s2045, 128, 128, 8
        $region44: #{tpu_custom_call.1} parent=39 // pred_fallthru
          _
      $region40: #{tpu_custom_call.1} parent=5 // pred_fallthru
        _
      %p2065 = scmp.le.s32.totalorder 2, %s14
      // Predicated region
      $region45: #{tpu_custom_call.1} parent=5 // pred_check
        %p2066 = pneg %p2065
      $region46: #{tpu_custom_call.1} parent=5 // pred_check_branch
        %2068 = sbr.rel (%p2066) target = $region48
      $region47: #{tpu_custom_call.1} parent=5 // pred_region
        %s2069 = ssub.s32 %s14, 2
        // Predicated region
        $region49: #{tpu_custom_call.1} parent=47 // pred_check
          %p2070 = pneg %p153
        $region50: #{tpu_custom_call.1} parent=47 // pred_check_branch
          %2072 = sbr.rel (%p2070) target = $region52
        $region51: #{tpu_custom_call.1} parent=47 // pred_region
          %s2073 = sand.u32 %s138, 1
          %s2074 = scalar_lea.sflag [#allocation3], %s2073
          %s2075 = sand.u32 %s138, 1
          %s2076 = smul.addr %s2075, 40
          %s2077 = scalar_lea.vmem [#allocation2], %s2076
          %2078 = dma.done %s2074, 640
        $region52: #{tpu_custom_call.1} parent=47 // pred_fallthru
          _
      $region48: #{tpu_custom_call.1} parent=5 // pred_fallthru
        _
    $region6: #{tpu_custom_call.1} parent=1 // loop_footer
      %s18 = sadd.s32 1, %s14
    $region7: #{tpu_custom_call.1} parent=1 // loop_footer_branch
      %13 = sbr.rel target = $region3
    $region8: #{tpu_custom_call.1} parent=1 // loop_exit
      _
    %2079 = vsyncpa [#allocation3], 1
    %s2080 = scalar_lea.sflag [#allocation3], 1
    %2081 = vsyncpa %s2080, 1

</llo_original>
